<compile_context>
chip_gen: v7x
topology: tpu7x:2x2x1
jax: 0.10.0
libtpu: 0.0.40
codegen_flags: <defaults>
</compile_context>

<pallas_src>
import functools

import jax
import jax.numpy as jnp
from jax.experimental import pallas as pl
from jax.experimental.pallas import tpu as pltpu


EPS = 1e-5


def _pick_tile(dhw, n_batch, cin, max_tile=2048,
               x_tile_budget_bytes=4 * 1024 * 1024):
    """Largest multiple of 128 dividing dhw, capped by max_tile and by a small
    VMEM budget for the double-buffered f32 x tile."""
    per_lane_bytes = 2 * 4 * n_batch * cin          # 2 buffers * f32 * (N*Cin)
    cap = min(max_tile, x_tile_budget_bytes // max(1, per_lane_bytes))
    best = None
    t = 128
    while t <= min(dhw, cap):
        if dhw % t == 0:
            best = t
        t += 128
    return best if best is not None else dhw        # full dim is always legal


# ------------------- fused 1x1 conv + BN(train) + PReLU --------------------- #

def _fused_conv_bn_prelu_kernel(w_ref, p_ref, x_ref, o_ref, sum_ref, sq_ref,
                                *, n_batch, tile, m_total):
    # w: (C, Cin) f32      p: (C, 4) f32 = [bias, gamma, beta, alpha]
    # x: (N, Cin, tile) f32 streamed tile
    # o: (N, C, DHW) f32   -- full output slab, resident in VMEM across the grid
    # sum/sq: (C, 1) f32   -- per-channel batch-stat accumulators (VMEM scratch)
    j = pl.program_id(0)

    @pl.when(j == 0)
    def _init():
        sum_ref[...] = jnp.zeros_like(sum_ref)
        sq_ref[...] = jnp.zeros_like(sq_ref)

    w = w_ref[...].astype(jnp.bfloat16)                # cast in-kernel for MXU
    bias = p_ref[...][:, 0:1]                          # (C, 1) f32

    off = pl.multiple_of(j * tile, 128)
    psum = jnp.zeros_like(sum_ref[...])
    psq = jnp.zeros_like(sq_ref[...])
    for n in range(n_batch):                           # small static batch
        x_n = x_ref[n].astype(jnp.bfloat16)            # (Cin, tile)
        y = jnp.dot(w, x_n, preferred_element_type=jnp.float32) + bias
        psum = psum + jnp.sum(y, axis=1, keepdims=True)
        psq = psq + jnp.sum(y * y, axis=1, keepdims=True)
        o_ref[n, :, pl.ds(off, tile)] = y              # stash pre-BN activations
    sum_ref[...] += psum
    sq_ref[...] += psq

    @pl.when(j == pl.num_programs(0) - 1)
    def _finalize():
        p = p_ref[...]
        gamma, beta, alpha = p[:, 1:2], p[:, 2:3], p[:, 3:4]
        mean = sum_ref[...] * (1.0 / m_total)
        var = sq_ref[...] * (1.0 / m_total) - mean * mean   # biased (training BN)
        inv = jax.lax.rsqrt(var + EPS)
        scale = gamma * inv                                  # (C, 1)
        shift = beta - mean * scale
        z = o_ref[...] * scale[None] + shift[None]           # (N, C, DHW)
        o_ref[...] = jnp.where(z > 0.0, z, alpha[None] * z)


# ------------------------------- forward ------------------------------------ #

def net_out_single_block_forward(params, x_ncdhw):
    N, Cin, D, H, W = x_ncdhw.shape
    C = params["w"].shape[0]
    DHW = D * H * W
    M = N * DHW

    tile = _pick_tile(DHW, N, Cin)
    grid_j = DHW // tile

    # Free view (merges contiguous trailing dims) -- no transpose copies.
    x3 = x_ncdhw.reshape(N, Cin, DHW).astype(jnp.float32)

    # Pack the per-channel parameters into one tiny (C, 4) operand.
    pvec = jnp.stack([params["b"], params["gamma"], params["beta"],
                      params["alpha"]], axis=1).astype(jnp.float32)

    kernel = functools.partial(_fused_conv_bn_prelu_kernel,
                               n_batch=N, tile=tile, m_total=M)

    out3 = pl.pallas_call(
        kernel,
        out_shape=jax.ShapeDtypeStruct((N, C, DHW), jnp.float32),
        grid=(grid_j,),
        in_specs=[pl.BlockSpec((C, Cin), lambda j: (0, 0)),
                  pl.BlockSpec((C, 4), lambda j: (0, 0)),
                  pl.BlockSpec((N, Cin, tile), lambda j: (0, 0, j))],
        out_specs=pl.BlockSpec((N, C, DHW), lambda j: (0, 0, 0)),
        scratch_shapes=[pltpu.VMEM((C, 1), jnp.float32),
                        pltpu.VMEM((C, 1), jnp.float32)],
        compiler_params=pltpu.CompilerParams(
            dimension_semantics=("arbitrary",),       # accumulator + finalize axis
            vmem_limit_bytes=32 * 1024 * 1024),        # safe headroom incl. v5e
    )(params["w"].astype(jnp.float32), pvec, x3)

    return out3.reshape(N, C, D, H, W)


# ------------------------------- reference ---------------------------------- #

def reference_forward(params, x):
    """Pure-JAX (XLA) f32 reference of the PyTorch module (training-mode BN)."""
    w = params["w"].astype(jnp.float32)
    y = jnp.einsum("ncdhw,kc->nkdhw", x, w) \
        + params["b"][None, :, None, None, None]
    mean = jnp.mean(y, axis=(0, 2, 3, 4), keepdims=True)
    var = jnp.mean((y - mean) ** 2, axis=(0, 2, 3, 4), keepdims=True)
    yn = (y - mean) * jax.lax.rsqrt(var + EPS)
    yn = yn * params["gamma"][None, :, None, None, None] \
         + params["beta"][None, :, None, None, None]
    a = params["alpha"][None, :, None, None, None]
    return jnp.where(yn > 0, yn, a * yn)


# --------------------------------- main -------------------------------------- #

if __name__ == "__main__":
    N, in_channels, classes = 2, 8, 4
    D = H = W = 16

    key = jax.random.PRNGKey(0)
    kx, kw, kb = jax.random.split(key, 3)
    x = jax.random.normal(kx, (N, in_channels, D, H, W), jnp.float32)
    params = {
        "w": jax.random.normal(kw, (classes, in_channels), jnp.float32) * 0.1,
        "b": jax.random.normal(kb, (classes,), jnp.float32) * 0.1,
        "gamma": jnp.ones((classes,), jnp.float32),
        "beta": jnp.zeros((classes,), jnp.float32),
        "alpha": jnp.full((classes,), 0.25, jnp.float32),   # PReLU default init
    }

    fwd = jax.jit(functools.partial(net_out_single_block_forward, params))
    out = fwd(x)
    jax.block_until_ready(out)

    assert out.shape == (N, classes, D, H, W)
    assert bool(jnp.all(jnp.isfinite(out)))

    # correctness check against a reference built from the same bf16-quantized
    # matmul inputs (kernel uses bf16 MXU inputs with f32 accumulation/epilogue)
    params_q = dict(params)
    params_q["w"] = params["w"].astype(jnp.bfloat16).astype(jnp.float32)
    x_q = x.astype(jnp.bfloat16).astype(jnp.float32)
    ref = reference_forward(params_q, x_q)
    max_err = float(jnp.max(jnp.abs(out - ref)))
    assert max_err < 1e-2, f"max abs err {max_err}"

    print("KERNEL_OK")
</pallas_src>

<mosaic_0001>
module attributes {stable_mosaic.version = 11 : i64} {
  func.func @_fused_conv_bn_prelu_kernel(%arg0: i32, %arg1: memref<4x8xf32, #tpu.memory_space<vmem>>, %arg2: memref<4x4xf32, #tpu.memory_space<vmem>>, %arg3: memref<2x8x2048xf32, #tpu.memory_space<vmem>>, %arg4: memref<2x4x4096xf32, #tpu.memory_space<vmem>>, %arg5: memref<4x1xf32, #tpu.memory_space<vmem>>, %arg6: memref<4x1xf32, #tpu.memory_space<vmem>>) attributes {dimension_semantics = [#tpu.dimension_semantics<arbitrary>], iteration_bounds = array<i64: 2>, scalar_prefetch = 0 : i64, scratch_operands = 2 : i64, tpu.core_type = #tpu.core_type<tc>, window_params = [{pipeline_mode = #tpu.pipeline_mode<synchronous>, transform_indices = @transform_0, window_bounds = array<i64: 4, 8>}, {pipeline_mode = #tpu.pipeline_mode<synchronous>, transform_indices = @transform_1, window_bounds = array<i64: 4, 4>}, {transform_indices = @transform_2, window_bounds = array<i64: 2, 8, 2048>}, {pipeline_mode = #tpu.pipeline_mode<synchronous>, transform_indices = @transform_3, window_bounds = array<i64: 2, 4, 4096>}]} {
    %c0_i32 = arith.constant 0 : i32
    %0 = arith.cmpi eq, %arg0, %c0_i32 : i32
    %1 = arith.extui %0 : i1 to i32
    %c0_i32_0 = arith.constant 0 : i32
    %2 = arith.cmpi ne, %1, %c0_i32_0 : i32
    scf.if %2 {
      %cst_29 = arith.constant 0.000000e+00 : f32
      %54 = vector.broadcast %cst_29 : f32 to vector<4x1xf32>
      %c0_30 = arith.constant 0 : index
      %c0_31 = arith.constant 0 : index
      %55 = vector.load %arg5[%c0_30, %c0_31] : memref<4x1xf32, #tpu.memory_space<vmem>>, vector<4x1xf32>
      tpu.vector_store %arg5[%c0_30, %c0_31], %54 {strides = array<i32>} : memref<4x1xf32, #tpu.memory_space<vmem>>, vector<4x1xf32>,
      %cst_32 = arith.constant 0.000000e+00 : f32
      %56 = vector.broadcast %cst_32 : f32 to vector<4x1xf32>
      %c0_33 = arith.constant 0 : index
      %c0_34 = arith.constant 0 : index
      %57 = vector.load %arg6[%c0_33, %c0_34] : memref<4x1xf32, #tpu.memory_space<vmem>>, vector<4x1xf32>
      tpu.vector_store %arg6[%c0_33, %c0_34], %56 {strides = array<i32>} : memref<4x1xf32, #tpu.memory_space<vmem>>, vector<4x1xf32>,
    } else {
    }
    %c0 = arith.constant 0 : index
    %c0_1 = arith.constant 0 : index
    %3 = vector.load %arg1[%c0, %c0_1] : memref<4x8xf32, #tpu.memory_space<vmem>>, vector<4x8xf32>
    %4 = arith.truncf %3 : vector<4x8xf32> to vector<4x8xbf16>
    %c0_2 = arith.constant 0 : index
    %c0_3 = arith.constant 0 : index
    %5 = vector.load %arg2[%c0_2, %c0_3] : memref<4x4xf32, #tpu.memory_space<vmem>>, vector<4x4xf32>
    %6 = vector.extract_strided_slice %5 {offsets = [0, 0], sizes = [4, 1], strides = [1, 1]} : vector<4x4xf32> to vector<4x1xf32>
    %c2048_i32 = arith.constant 2048 : i32
    %7 = arith.muli %arg0, %c2048_i32 : i32
    %8 = tpu.assume_multiple %7, 128 : i32
    %cst = arith.constant 0.000000e+00 : f32
    %9 = vector.broadcast %cst : f32 to vector<4x1xf32>
    %cst_4 = arith.constant 0.000000e+00 : f32
    %10 = vector.broadcast %cst_4 : f32 to vector<4x1xf32>
    %c0_5 = arith.constant 0 : index
    %c0_6 = arith.constant 0 : index
    %c0_7 = arith.constant 0 : index
    %11 = vector.load %arg3[%c0_5, %c0_6, %c0_7] : memref<2x8x2048xf32, #tpu.memory_space<vmem>>, vector<1x8x2048xf32>
    %12 = vector.shape_cast %11 : vector<1x8x2048xf32> to vector<8x2048xf32>
    %13 = arith.truncf %12 : vector<8x2048xf32> to vector<8x2048xbf16>
    %cst_8 = arith.constant dense<0.000000e+00> : vector<4x2048xf32>
    %14 = tpu.matmul %4, %13, %cst_8 {dimension_numbers = #tpu.dot_dimension_numbers<[1], [0], [0], [1], [0, 0, 1, 1], [], []>} : vector<4x8xbf16>, vector<8x2048xbf16>, vector<4x2048xf32> -> vector<4x2048xf32>
    %15 = vector.broadcast %6 : vector<4x1xf32> to vector<4x2048xf32>
    %16 = arith.addf %14, %15 : vector<4x2048xf32>
    %cst_9 = arith.constant dense<0.000000e+00> : vector<4xf32>
    %17 = vector.multi_reduction <add>, %16, %cst_9 [1] : vector<4x2048xf32> to vector<4xf32>
    %18 = vector.shape_cast %17 : vector<4xf32> to vector<4x1xf32>
    %19 = arith.addf %9, %18 : vector<4x1xf32>
    %20 = arith.mulf %16, %16 : vector<4x2048xf32>
    %cst_10 = arith.constant dense<0.000000e+00> : vector<4xf32>
    %21 = vector.multi_reduction <add>, %20, %cst_10 [1] : vector<4x2048xf32> to vector<4xf32>
    %22 = vector.shape_cast %21 : vector<4xf32> to vector<4x1xf32>
    %23 = arith.addf %10, %22 : vector<4x1xf32>
    %c0_11 = arith.constant 0 : index
    %c0_12 = arith.constant 0 : index
    %24 = arith.index_cast %8 : i32 to index
    %25 = vector.load %arg4[%c0_11, %c0_12, %24] : memref<2x4x4096xf32, #tpu.memory_space<vmem>>, vector<1x4x2048xf32>
    %26 = vector.shape_cast %25 : vector<1x4x2048xf32> to vector<4x2048xf32>
    %27 = vector.shape_cast %16 : vector<4x2048xf32> to vector<1x4x2048xf32>
    tpu.vector_store %arg4[%c0_11, %c0_12, %24], %27 {strides = array<i32>} : memref<2x4x4096xf32, #tpu.memory_space<vmem>>, vector<1x4x2048xf32>,
    %c1 = arith.constant 1 : index
    %c0_13 = arith.constant 0 : index
    %c0_14 = arith.constant 0 : index
    %28 = vector.load %arg3[%c1, %c0_13, %c0_14] : memref<2x8x2048xf32, #tpu.memory_space<vmem>>, vector<1x8x2048xf32>
    %29 = vector.shape_cast %28 : vector<1x8x2048xf32> to vector<8x2048xf32>
    %30 = arith.truncf %29 : vector<8x2048xf32> to vector<8x2048xbf16>
    %cst_15 = arith.constant dense<0.000000e+00> : vector<4x2048xf32>
    %31 = tpu.matmul %4, %30, %cst_15 {dimension_numbers = #tpu.dot_dimension_numbers<[1], [0], [0], [1], [0, 0, 1, 1], [], []>} : vector<4x8xbf16>, vector<8x2048xbf16>, vector<4x2048xf32> -> vector<4x2048xf32>
    %32 = vector.broadcast %6 : vector<4x1xf32> to vector<4x2048xf32>
    %33 = arith.addf %31, %32 : vector<4x2048xf32>
    %cst_16 = arith.constant dense<0.000000e+00> : vector<4xf32>
    %34 = vector.multi_reduction <add>, %33, %cst_16 [1] : vector<4x2048xf32> to vector<4xf32>
    %35 = vector.shape_cast %34 : vector<4xf32> to vector<4x1xf32>
    %36 = arith.addf %19, %35 : vector<4x1xf32>
    %37 = arith.mulf %33, %33 : vector<4x2048xf32>
    %cst_17 = arith.constant dense<0.000000e+00> : vector<4xf32>
    %38 = vector.multi_reduction <add>, %37, %cst_17 [1] : vector<4x2048xf32> to vector<4xf32>
    %39 = vector.shape_cast %38 : vector<4xf32> to vector<4x1xf32>
    %40 = arith.addf %23, %39 : vector<4x1xf32>
    %c1_18 = arith.constant 1 : index
    %c0_19 = arith.constant 0 : index
    %41 = arith.index_cast %8 : i32 to index
    %42 = vector.load %arg4[%c1_18, %c0_19, %41] : memref<2x4x4096xf32, #tpu.memory_space<vmem>>, vector<1x4x2048xf32>
    %43 = vector.shape_cast %42 : vector<1x4x2048xf32> to vector<4x2048xf32>
    %44 = vector.shape_cast %33 : vector<4x2048xf32> to vector<1x4x2048xf32>
    tpu.vector_store %arg4[%c1_18, %c0_19, %41], %44 {strides = array<i32>} : memref<2x4x4096xf32, #tpu.memory_space<vmem>>, vector<1x4x2048xf32>,
    %c0_20 = arith.constant 0 : index
    %c0_21 = arith.constant 0 : index
    %45 = vector.load %arg5[%c0_20, %c0_21] : memref<4x1xf32, #tpu.memory_space<vmem>>, vector<4x1xf32>
    %46 = arith.addf %45, %36 : vector<4x1xf32>
    %c0_22 = arith.constant 0 : index
    %c0_23 = arith.constant 0 : index
    %47 = vector.load %arg5[%c0_22, %c0_23] : memref<4x1xf32, #tpu.memory_space<vmem>>, vector<4x1xf32>
    tpu.vector_store %arg5[%c0_22, %c0_23], %46 {strides = array<i32>} : memref<4x1xf32, #tpu.memory_space<vmem>>, vector<4x1xf32>,
    %c0_24 = arith.constant 0 : index
    %c0_25 = arith.constant 0 : index
    %48 = vector.load %arg6[%c0_24, %c0_25] : memref<4x1xf32, #tpu.memory_space<vmem>>, vector<4x1xf32>
    %49 = arith.addf %48, %40 : vector<4x1xf32>
    %c0_26 = arith.constant 0 : index
    %c0_27 = arith.constant 0 : index
    %50 = vector.load %arg6[%c0_26, %c0_27] : memref<4x1xf32, #tpu.memory_space<vmem>>, vector<4x1xf32>
    tpu.vector_store %arg6[%c0_26, %c0_27], %49 {strides = array<i32>} : memref<4x1xf32, #tpu.memory_space<vmem>>, vector<4x1xf32>,
    %c1_i32 = arith.constant 1 : i32
    %51 = arith.cmpi eq, %arg0, %c1_i32 : i32
    %52 = arith.extui %51 : i1 to i32
    %c0_i32_28 = arith.constant 0 : i32
    %53 = arith.cmpi ne, %52, %c0_i32_28 : i32
    scf.if %53 {
      %c0_29 = arith.constant 0 : index
      %c0_30 = arith.constant 0 : index
      %54 = vector.load %arg2[%c0_29, %c0_30] : memref<4x4xf32, #tpu.memory_space<vmem>>, vector<4x4xf32>
      %55 = vector.extract_strided_slice %54 {offsets = [0, 1], sizes = [4, 1], strides = [1, 1]} : vector<4x4xf32> to vector<4x1xf32>
      %56 = vector.extract_strided_slice %54 {offsets = [0, 2], sizes = [4, 1], strides = [1, 1]} : vector<4x4xf32> to vector<4x1xf32>
      %57 = vector.extract_strided_slice %54 {offsets = [0, 3], sizes = [4, 1], strides = [1, 1]} : vector<4x4xf32> to vector<4x1xf32>
      %c0_31 = arith.constant 0 : index
      %c0_32 = arith.constant 0 : index
      %58 = vector.load %arg5[%c0_31, %c0_32] : memref<4x1xf32, #tpu.memory_space<vmem>>, vector<4x1xf32>
      %cst_33 = arith.constant 1.22070313E-4 : f32
      %59 = vector.broadcast %cst_33 : f32 to vector<4x1xf32>
      %60 = arith.mulf %58, %59 : vector<4x1xf32>
      %c0_34 = arith.constant 0 : index
      %c0_35 = arith.constant 0 : index
      %61 = vector.load %arg6[%c0_34, %c0_35] : memref<4x1xf32, #tpu.memory_space<vmem>>, vector<4x1xf32>
      %cst_36 = arith.constant 1.22070313E-4 : f32
      %62 = vector.broadcast %cst_36 : f32 to vector<4x1xf32>
      %63 = arith.mulf %61, %62 : vector<4x1xf32>
      %64 = arith.mulf %60, %60 : vector<4x1xf32>
      %65 = arith.subf %63, %64 : vector<4x1xf32>
      %cst_37 = arith.constant 9.99999974E-6 : f32
      %66 = vector.broadcast %cst_37 : f32 to vector<4x1xf32>
      %67 = arith.addf %65, %66 : vector<4x1xf32>
      %68 = math.rsqrt %67 : vector<4x1xf32>
      %69 = arith.mulf %55, %68 : vector<4x1xf32>
      %70 = arith.mulf %60, %69 : vector<4x1xf32>
      %71 = arith.subf %56, %70 : vector<4x1xf32>
      %c0_38 = arith.constant 0 : index
      %c0_39 = arith.constant 0 : index
      %c0_40 = arith.constant 0 : index
      %72 = vector.load %arg4[%c0_38, %c0_39, %c0_40] : memref<2x4x4096xf32, #tpu.memory_space<vmem>>, vector<2x4x4096xf32>
      %73 = vector.shape_cast %69 : vector<4x1xf32> to vector<1x4x1xf32>
      %74 = vector.broadcast %73 : vector<1x4x1xf32> to vector<2x4x4096xf32>
      %75 = arith.mulf %72, %74 : vector<2x4x4096xf32>
      %76 = vector.shape_cast %71 : vector<4x1xf32> to vector<1x4x1xf32>
      %77 = vector.broadcast %76 : vector<1x4x1xf32> to vector<2x4x4096xf32>
      %78 = arith.addf %75, %77 : vector<2x4x4096xf32>
      %cst_41 = arith.constant 0.000000e+00 : f32
      %79 = vector.broadcast %cst_41 : f32 to vector<2x4x4096xf32>
      %80 = arith.cmpf ogt, %78, %79 : vector<2x4x4096xf32>
      %81 = vector.shape_cast %57 : vector<4x1xf32> to vector<1x4x1xf32>
      %82 = vector.broadcast %81 : vector<1x4x1xf32> to vector<2x4x4096xf32>
      %83 = arith.mulf %82, %78 : vector<2x4x4096xf32>
      %84 = arith.select %80, %78, %83 : vector<2x4x4096xi1>, vector<2x4x4096xf32>
      %c0_42 = arith.constant 0 : index
      %c0_43 = arith.constant 0 : index
      %c0_44 = arith.constant 0 : index
      %85 = vector.load %arg4[%c0_42, %c0_43, %c0_44] : memref<2x4x4096xf32, #tpu.memory_space<vmem>>, vector<2x4x4096xf32>
      tpu.vector_store %arg4[%c0_42, %c0_43, %c0_44], %84 {strides = array<i32>} : memref<2x4x4096xf32, #tpu.memory_space<vmem>>, vector<2x4x4096xf32>,
    } else {
    }
    return
  }
  func.func @transform_0(%arg0: i32) -> (i32, i32) {
    %c0_i32 = arith.constant 0 : i32
    %c0_i32_0 = arith.constant 0 : i32
    %c0_i32_1 = arith.constant 0 : i32
    return %c0_i32, %c0_i32_0 : i32, i32
  }
  func.func @transform_1(%arg0: i32) -> (i32, i32) {
    %c0_i32 = arith.constant 0 : i32
    %c0_i32_0 = arith.constant 0 : i32
    %c0_i32_1 = arith.constant 0 : i32
    return %c0_i32, %c0_i32_0 : i32, i32
  }
  func.func @transform_2(%arg0: i32) -> (i32, i32, i32) {
    %c0_i32 = arith.constant 0 : i32
    %c0_i32_0 = arith.constant 0 : i32
    %c0_i32_1 = arith.constant 0 : i32
    return %c0_i32, %c0_i32_0, %arg0 : i32, i32, i32
  }
  func.func @transform_3(%arg0: i32) -> (i32, i32, i32) {
    %c0_i32 = arith.constant 0 : i32
    %c0_i32_0 = arith.constant 0 : i32
    %c0_i32_1 = arith.constant 0 : i32
    %c0_i32_2 = arith.constant 0 : i32
    return %c0_i32, %c0_i32_0, %c0_i32_1 : i32, i32, i32
  }
}

</mosaic_0001>

<llo_original>
// kernel: net_out_single_block_forward.1
$region0: #{net_out_single_block_forward.1}
  #allocation0 [shape = 'u32[]', space=smem, size = 0x4, offset = 0x4, fixed_abs, tag = 'smem constant byte address 0x4 - core index']
  #allocation1 [shape = 'u32[144,128]{1,0:T(1,128)}', space=vmem, size = 0x12000, scoped, tag = 'internal scratch']
  #allocation2 [shape = 'f32[4,1]{1,0:T(4,128)}', space=vmem, size = 0x800, scoped, tag = 'scratch operand']
  #allocation3 [shape = 'f32[4,1]{1,0:T(4,128)}', space=vmem, size = 0x800, scoped, tag = 'scratch operand']
  %s0 = inlined_call_operand.vmem [shape: f32[4,8], index: 0, kind: input, shape index: {}]
  %s1 = inlined_call_operand.vmem [shape: f32[4,4], index: 1, kind: input, shape index: {}]
  %s2 = inlined_call_operand.vmem [shape: f32[2,8,4096], index: 2, kind: input, shape index: {}]
  %s3 = inlined_call_operand.vmem [shape: f32[2,4,4096], index: 3, kind: output, shape index: {}]
  %s4 = sld [smem:[#allocation0]]
  $region76: #{net_out_single_block_forward.1} parent=0
    _
  %s6 = ssub.s32 1, %s4
  %s7 = scalar_select 0, %s6, %s4
  $region1: #{net_out_single_block_forward.1} parent=0
    #allocation4 [shape = 'u8[262144]{0}', space=vmem, size = 0x40000, scoped, tag = 'input window, operand 2']
    loop: start=0, step=1, limit=4
    $region2: #{net_out_single_block_forward.1} parent=1 // loop_pre_header
      _
    $region3: #{net_out_single_block_forward.1} parent=1 // loop_header
      %s9 = sphi 0, %s13
      %p10 = scmp.ge.s32.totalorder %s9, 4
      %s17 = sphi 0, %s17
      %s19 = sphi 0, %s17
      %s20 = sphi 0, %s19
      %s34 = sphi 0, %s20
      %s38 = sphi 0, %s38
      %s40 = sphi 0, %s38
      %s41 = sphi 0, %s40
      %s55 = sphi 0, %s41
      %s61 = sphi 0, %s63
      %s64 = sphi 0, %s61
      %s65 = sphi 0, %s64
      %s81 = sphi 0, %s65
      %s85 = sphi 0, %s85
      %s87 = sphi 0, %s85
      %s88 = sphi 0, %s87
      %s102 = sphi 0, %s88
    $region4: #{net_out_single_block_forward.1} parent=1 // loop_header_branch
      %12 = sbr.rel (%p10) target = $region8
    $region5: #{net_out_single_block_forward.1} parent=1 // loop_body
      %s14 = ssub.s32 %s9, 1
      %s15 = ssub.s32 %s9, 2
      %s16 = sadd.s32 %s9, 1
      %s18 = sadd.s32 %s17, 1
      %p21 = scmp.eq.s32.totalorder %s9, 1
      %p22 = scmp.ne.s32.totalorder %s17, %s19
      %p23 = scmp.eq.s32.totalorder %s9, 0
      %p24 = por %p22, %p23
      %p25 = scmp.ne.s32.totalorder %s17, %s19
      %p26 = scmp.eq.s32.totalorder %s14, 1
      %p27 = por %p25, %p26
      %p28 = scmp.ne.s32.totalorder %s19, %s20
      %p29 = scmp.eq.s32.totalorder %s14, 0
      %p30 = por %p28, %p29
      %p31 = scmp.ne.s32.totalorder %s19, %s20
      %p32 = scmp.eq.s32.totalorder %s15, 1
      %p33 = por %p31, %p32
      %p35 = scmp.ne.s32.totalorder %s20, %s34
      %p36 = scmp.eq.s32.totalorder %s15, 0
      %p37 = por %p35, %p36
      %s39 = sadd.s32 %s38, 1
      %p42 = scmp.eq.s32.totalorder %s9, 1
      %p43 = scmp.ne.s32.totalorder %s38, %s40
      %p44 = scmp.eq.s32.totalorder %s9, 0
      %p45 = por %p43, %p44
      %p46 = scmp.ne.s32.totalorder %s38, %s40
      %p47 = scmp.eq.s32.totalorder %s14, 1
      %p48 = por %p46, %p47
      %p49 = scmp.ne.s32.totalorder %s40, %s41
      %p50 = scmp.eq.s32.totalorder %s14, 0
      %p51 = por %p49, %p50
      %p52 = scmp.ne.s32.totalorder %s40, %s41
      %p53 = scmp.eq.s32.totalorder %s15, 1
      %p54 = por %p52, %p53
      %p56 = scmp.ne.s32.totalorder %s41, %s55
      %p57 = scmp.eq.s32.totalorder %s15, 0
      %p58 = por %p56, %p57
      %s59 = ssub.s32 %s9, %s16
      %p60 = scmp.eq.s32.totalorder %s59, 0
      %s62 = sadd.s32 %s61, 1
      %s63 = scalar_select %p60, %s61, %s62
      %p66 = pneg %p60
      %p67 = scmp.eq.s32.totalorder %s9, 1
      %p68 = por %p66, %p67
      %p69 = scmp.ne.s32.totalorder %s61, %s64
      %p70 = scmp.eq.s32.totalorder %s9, 0
      %p71 = por %p69, %p70
      %p72 = scmp.ne.s32.totalorder %s61, %s64
      %p73 = scmp.eq.s32.totalorder %s14, 1
      %p74 = por %p72, %p73
      %p75 = scmp.ne.s32.totalorder %s64, %s65
      %p76 = scmp.eq.s32.totalorder %s14, 0
      %p77 = por %p75, %p76
      %p78 = scmp.ne.s32.totalorder %s64, %s65
      %p79 = scmp.eq.s32.totalorder %s15, 1
      %p80 = por %p78, %p79
      %p82 = scmp.ne.s32.totalorder %s65, %s81
      %p83 = scmp.eq.s32.totalorder %s15, 0
      %p84 = por %p82, %p83
      %s86 = sadd.s32 %s85, 1
      %p89 = scmp.eq.s32.totalorder %s9, 1
      %p90 = scmp.ne.s32.totalorder %s85, %s87
      %p91 = scmp.eq.s32.totalorder %s9, 0
      %p92 = por %p90, %p91
      %p93 = scmp.ne.s32.totalorder %s85, %s87
      %p94 = scmp.eq.s32.totalorder %s14, 1
      %p95 = por %p93, %p94
      %p96 = scmp.ne.s32.totalorder %s87, %s88
      %p97 = scmp.eq.s32.totalorder %s14, 0
      %p98 = por %p96, %p97
      %p99 = scmp.ne.s32.totalorder %s87, %s88
      %p100 = scmp.eq.s32.totalorder %s15, 1
      %p101 = por %p99, %p100
      %p103 = scmp.ne.s32.totalorder %s88, %s102
      %p104 = scmp.eq.s32.totalorder %s15, 0
      %p105 = por %p103, %p104
      %p106 = scmp.le.s32.totalorder 1, %s9
      %p107 = scmp.lt.s32.totalorder %s9, 3
      %p108 = pnand %p106, %p107
      %p109 = pneg %p108
      // Predicated region
      $region9: #{net_out_single_block_forward.1} parent=5 // pred_check
        _
      $region10: #{net_out_single_block_forward.1} parent=5 // pred_check_branch
        %111 = sbr.rel (%p108) target = $region12
      $region11: #{net_out_single_block_forward.1} parent=5 // pred_region
        %s112 = ssub.s32 %s9, 1
        // Predicated region
        $region13: #{net_out_single_block_forward.1} parent=11 // pred_check
          %p113 = pneg %p30
        $region14: #{net_out_single_block_forward.1} parent=11 // pred_check_branch
          %115 = sbr.rel (%p113) target = $region16
        $region15: #{net_out_single_block_forward.1} parent=11 // pred_region
          _
        $region16: #{net_out_single_block_forward.1} parent=11 // pred_fallthru
          _
        // Predicated region
        $region17: #{net_out_single_block_forward.1} parent=11 // pred_check
          %p116 = pneg %p51
        $region18: #{net_out_single_block_forward.1} parent=11 // pred_check_branch
          %118 = sbr.rel (%p116) target = $region20
        $region19: #{net_out_single_block_forward.1} parent=11 // pred_region
          _
        $region20: #{net_out_single_block_forward.1} parent=11 // pred_fallthru
          _
      $region12: #{net_out_single_block_forward.1} parent=5 // pred_fallthru
        _
      %p119 = scmp.lt.s32.totalorder %s9, 2
      // Predicated region
      $region21: #{net_out_single_block_forward.1} parent=5 // pred_check
        %p120 = pneg %p119
      $region22: #{net_out_single_block_forward.1} parent=5 // pred_check_branch
        %122 = sbr.rel (%p120) target = $region24
      $region23: #{net_out_single_block_forward.1} parent=5 // pred_region
        // Predicated region
        $region25: #{net_out_single_block_forward.1} parent=23 // pred_check
          %p123 = pneg %p71
        $region26: #{net_out_single_block_forward.1} parent=23 // pred_check_branch
          %125 = sbr.rel (%p123) target = $region28
        $region27: #{net_out_single_block_forward.1} parent=23 // pred_region
          %s126 = sand.u32 %s61, 1
          %s127 = sand.u32 %s61, 1
          %s128 = smul.addr %s127, 256
          %s129 = scalar_lea.vmem [#allocation4], %s128
          %s130 = smul.u32 16, %s9
          %s131 = smul.addr %s130, 8
          %s132 = scalar_lea.vmem %s2, %s131
          // Predicated region
          $region29: #{net_out_single_block_forward.1} parent=27 // pred_check
            _
          $region30: #{net_out_single_block_forward.1} parent=27 // pred_check_branch
            %134 = sbr.rel (0) target = $region32
          $region31: #{net_out_single_block_forward.1} parent=27 // pred_region
            // Predicated region
            $region33: #{net_out_single_block_forward.1} parent=31 // pred_check
              _
            $region34: #{net_out_single_block_forward.1} parent=31 // pred_check_branch
              %136 = sbr.rel (0) target = $region36
            $region35: #{net_out_single_block_forward.1} parent=31 // pred_region
              loop: start=0, step=1, limit=1
              $region37: #{net_out_single_block_forward.1} parent=35 // loop_pre_header
                _
              $region38: #{net_out_single_block_forward.1} parent=35 // loop_header
                %s138 = sphi 0, %s142
                %p139 = scmp.ge.s32.totalorder %s138, 1
                %s143 = sphi %s132, %s132
                %s144 = sphi %s129, %s129
              $region39: #{net_out_single_block_forward.1} parent=35 // loop_header_branch
                %141 = sbr.rel (%p139) target = $region43
              $region40: #{net_out_single_block_forward.1} parent=35 // loop_body
                %v145 = vld [vmem:[%s143] sm:$0xff]
                %146 = vst [vmem:[%s144] sm:$0xff] %v145
                %v147 = vld [vmem:[%s143 + $0x8] sm:$0xff]
                %148 = vst [vmem:[%s144 + $0x8] sm:$0xff] %v147
                %v149 = vld [vmem:[%s143 + $0x10] sm:$0xff]
                %150 = vst [vmem:[%s144 + $0x10] sm:$0xff] %v149
                %v151 = vld [vmem:[%s143 + $0x18] sm:$0xff]
                %152 = vst [vmem:[%s144 + $0x18] sm:$0xff] %v151
                %v153 = vld [vmem:[%s143 + $0x20] sm:$0xff]
                %154 = vst [vmem:[%s144 + $0x20] sm:$0xff] %v153
                %v155 = vld [vmem:[%s143 + $0x28] sm:$0xff]
                %156 = vst [vmem:[%s144 + $0x28] sm:$0xff] %v155
                %v157 = vld [vmem:[%s143 + $0x30] sm:$0xff]
                %158 = vst [vmem:[%s144 + $0x30] sm:$0xff] %v157
                %v159 = vld [vmem:[%s143 + $0x38] sm:$0xff]
                %160 = vst [vmem:[%s144 + $0x38] sm:$0xff] %v159
                %v161 = vld [vmem:[%s143 + $0x40] sm:$0xff]
                %162 = vst [vmem:[%s144 + $0x40] sm:$0xff] %v161
                %v163 = vld [vmem:[%s143 + $0x48] sm:$0xff]
                %164 = vst [vmem:[%s144 + $0x48] sm:$0xff] %v163
                %v165 = vld [vmem:[%s143 + $0x50] sm:$0xff]
                %166 = vst [vmem:[%s144 + $0x50] sm:$0xff] %v165
                %v167 = vld [vmem:[%s143 + $0x58] sm:$0xff]
                %168 = vst [vmem:[%s144 + $0x58] sm:$0xff] %v167
                %v169 = vld [vmem:[%s143 + $0x60] sm:$0xff]
                %170 = vst [vmem:[%s144 + $0x60] sm:$0xff] %v169
                %v171 = vld [vmem:[%s143 + $0x68] sm:$0xff]
                %172 = vst [vmem:[%s144 + $0x68] sm:$0xff] %v171
                %v173 = vld [vmem:[%s143 + $0x70] sm:$0xff]
                %174 = vst [vmem:[%s144 + $0x70] sm:$0xff] %v173
                %v175 = vld [vmem:[%s143 + $0x78] sm:$0xff]
                %176 = vst [vmem:[%s144 + $0x78] sm:$0xff] %v175
                %v177 = vld [vmem:[%s143 + $0x100] sm:$0xff]
                %178 = vst [vmem:[%s144 + $0x80] sm:$0xff] %v177
                %v179 = vld [vmem:[%s143 + $0x108] sm:$0xff]
                %180 = vst [vmem:[%s144 + $0x88] sm:$0xff] %v179
                %v181 = vld [vmem:[%s143 + $0x110] sm:$0xff]
                %182 = vst [vmem:[%s144 + $0x90] sm:$0xff] %v181
                %v183 = vld [vmem:[%s143 + $0x118] sm:$0xff]
                %184 = vst [vmem:[%s144 + $0x98] sm:$0xff] %v183
                %v185 = vld [vmem:[%s143 + $0x120] sm:$0xff]
                %186 = vst [vmem:[%s144 + $0xa0] sm:$0xff] %v185
                %v187 = vld [vmem:[%s143 + $0x128] sm:$0xff]
                %188 = vst [vmem:[%s144 + $0xa8] sm:$0xff] %v187
                %v189 = vld [vmem:[%s143 + $0x130] sm:$0xff]
                %190 = vst [vmem:[%s144 + $0xb0] sm:$0xff] %v189
                %v191 = vld [vmem:[%s143 + $0x138] sm:$0xff]
                %192 = vst [vmem:[%s144 + $0xb8] sm:$0xff] %v191
                %v193 = vld [vmem:[%s143 + $0x140] sm:$0xff]
                %194 = vst [vmem:[%s144 + $0xc0] sm:$0xff] %v193
                %v195 = vld [vmem:[%s143 + $0x148] sm:$0xff]
                %196 = vst [vmem:[%s144 + $0xc8] sm:$0xff] %v195
                %v197 = vld [vmem:[%s143 + $0x150] sm:$0xff]
                %198 = vst [vmem:[%s144 + $0xd0] sm:$0xff] %v197
                %v199 = vld [vmem:[%s143 + $0x158] sm:$0xff]
                %200 = vst [vmem:[%s144 + $0xd8] sm:$0xff] %v199
                %v201 = vld [vmem:[%s143 + $0x160] sm:$0xff]
                %202 = vst [vmem:[%s144 + $0xe0] sm:$0xff] %v201
                %v203 = vld [vmem:[%s143 + $0x168] sm:$0xff]
                %204 = vst [vmem:[%s144 + $0xe8] sm:$0xff] %v203
                %v205 = vld [vmem:[%s143 + $0x170] sm:$0xff]
                %206 = vst [vmem:[%s144 + $0xf0] sm:$0xff] %v205
                %v207 = vld [vmem:[%s143 + $0x178] sm:$0xff]
                %208 = vst [vmem:[%s144 + $0xf8] sm:$0xff] %v207
              $region41: #{net_out_single_block_forward.1} parent=35 // loop_footer
                %s142 = sadd.s32 1, %s138
              $region42: #{net_out_single_block_forward.1} parent=35 // loop_footer_branch
                %137 = sbr.rel target = $region38
              $region43: #{net_out_single_block_forward.1} parent=35 // loop_exit
                _
            $region36: #{net_out_single_block_forward.1} parent=31 // pred_fallthru
              _
            // Predicated region
            $region44: #{net_out_single_block_forward.1} parent=31 // pred_check
              _
            $region45: #{net_out_single_block_forward.1} parent=31 // pred_check_branch
              %210 = sbr.rel target = $region47
            $region46: #{net_out_single_block_forward.1} parent=31 // pred_region
              _
            $region47: #{net_out_single_block_forward.1} parent=31 // pred_fallthru
              _
          $region32: #{net_out_single_block_forward.1} parent=27 // pred_fallthru
            _
          %211 = vnop
        $region28: #{net_out_single_block_forward.1} parent=23 // pred_fallthru
          _
      $region24: #{net_out_single_block_forward.1} parent=5 // pred_fallthru
        _
      %p212 = scmp.le.s32.totalorder 1, %s9
      %p213 = scmp.lt.s32.totalorder %s9, 3
      %p214 = pnand %p212, %p213
      %p215 = pneg %p214
      // Predicated region
      $region48: #{net_out_single_block_forward.1} parent=5 // pred_check
        _
      $region49: #{net_out_single_block_forward.1} parent=5 // pred_check_branch
        %217 = sbr.rel (%p214) target = $region51
      $region50: #{net_out_single_block_forward.1} parent=5 // pred_region
        %s218 = ssub.s32 %s9, 1
        %s219 = sand.u32 %s64, 1
        %s220 = sand.u32 %s64, 1
        %s221 = smul.addr %s220, 256
        %s222 = scalar_lea.vmem [#allocation4], %s221
        // Predicated region
        $region52: #{net_out_single_block_forward.1} parent=50 // pred_check
          %p223 = pneg %p77
        $region53: #{net_out_single_block_forward.1} parent=50 // pred_check_branch
          %225 = sbr.rel (%p223) target = $region55
        $region54: #{net_out_single_block_forward.1} parent=50 // pred_region
          _
        $region55: #{net_out_single_block_forward.1} parent=50 // pred_fallthru
          _
        %p226 = pneg %p30
        %p227 = pneg %p27
        %p228 = pneg %p51
        %p229 = pneg %p48
        %s230 = sand.u32 %s64, 1
        %s231 = sand.u32 %s64, 1
        %s232 = smul.addr %s231, 256
        %s233 = scalar_lea.vmem [#allocation4], %s232
        %p234 = pneg %p77
        %p235 = pneg %p74
        %p236 = pneg %p98
        %p237 = pneg %p95
        %s238 = smul.u32 16, %s14
        %p240 = scmp.eq.s32.totalorder %s14, 0
        // Predicated region
        $region56: #{net_out_single_block_forward.1} parent=50 // pred_check
          %p241 = pneg %p240
        $region57: #{net_out_single_block_forward.1} parent=50 // pred_check_branch
          %243 = sbr.rel (%p241) target = $region59
        $region58: #{net_out_single_block_forward.1} parent=50 // pred_region
          %vm244 = vcmask 3072
          %245 = vst.msk [vmem:[#allocation2] sm:$0xf] %vm244, 0.0
          %246 = vst.msk [vmem:[#allocation3] sm:$0xf] %vm244, 0.0
        $region59: #{net_out_single_block_forward.1} parent=50 // pred_fallthru
          _
        %v247 = vld [vmem:[%s0] sm:$0xf]
        %v248 = vpack.c.bf16 %v247, %v247
        %v249 = vld [vmem:[%s1] sm:$0xf]
        %s250 = smul.u32 %s14, 2048
        %v251 = vld [vmem:[%s222] sm:$0xff]
        %v252 = vld [vmem:[%s222 + $0x8] sm:$0xff]
        %v253 = vld [vmem:[%s222 + $0x10] sm:$0xff]
        %v254 = vld [vmem:[%s222 + $0x18] sm:$0xff]
        %v255 = vld [vmem:[%s222 + $0x20] sm:$0xff]
        %v256 = vld [vmem:[%s222 + $0x28] sm:$0xff]
        %v257 = vld [vmem:[%s222 + $0x30] sm:$0xff]
        %v258 = vld [vmem:[%s222 + $0x38] sm:$0xff]
        %v259 = vld [vmem:[%s222 + $0x40] sm:$0xff]
        %v260 = vld [vmem:[%s222 + $0x48] sm:$0xff]
        %v261 = vld [vmem:[%s222 + $0x50] sm:$0xff]
        %v262 = vld [vmem:[%s222 + $0x58] sm:$0xff]
        %v263 = vld [vmem:[%s222 + $0x60] sm:$0xff]
        %v264 = vld [vmem:[%s222 + $0x68] sm:$0xff]
        %v265 = vld [vmem:[%s222 + $0x70] sm:$0xff]
        %v266 = vld [vmem:[%s222 + $0x78] sm:$0xff]
        %v267 = vpack.c.bf16 %v251, %v251
        %v268 = vpack.c.bf16 %v252, %v252
        %v269 = vpack.c.bf16 %v253, %v253
        %v270 = vpack.c.bf16 %v254, %v254
        %v271 = vpack.c.bf16 %v255, %v255
        %v272 = vpack.c.bf16 %v256, %v256
        %v273 = vpack.c.bf16 %v257, %v257
        %v274 = vpack.c.bf16 %v258, %v258
        %v275 = vpack.c.bf16 %v259, %v259
        %v276 = vpack.c.bf16 %v260, %v260
        %v277 = vpack.c.bf16 %v261, %v261
        %v278 = vpack.c.bf16 %v262, %v262
        %v279 = vpack.c.bf16 %v263, %v263
        %v280 = vpack.c.bf16 %v264, %v264
        %v281 = vpack.c.bf16 %v265, %v265
        %v282 = vpack.c.bf16 %v266, %v266
        %284 = vset.pattern.permute.xlu0 0
        %285 = vperm.xlu0 %284, %v249
        %v286 = vpop.permute.xlu0 %285
        %vm288 = vcmask 64512
        %v290 = vsel %vm288, %v248, 0
        %vm292 = vcmask 1043456
        %v294 = vsel %vm292, %v267, 0
        %v297 = vsel %vm292, %v268, 0
        %v300 = vsel %vm292, %v269, 0
        %v303 = vsel %vm292, %v270, 0
        %v306 = vsel %vm292, %v271, 0
        %v309 = vsel %vm292, %v272, 0
        %v312 = vsel %vm292, %v273, 0
        %v315 = vsel %vm292, %v274, 0
        %v318 = vsel %vm292, %v275, 0
        %v321 = vsel %vm292, %v276, 0
        %v324 = vsel %vm292, %v277, 0
        %v327 = vsel %vm292, %v278, 0
        %v330 = vsel %vm292, %v279, 0
        %v333 = vsel %vm292, %v280, 0
        %v336 = vsel %vm292, %v281, 0
        %v339 = vsel %vm292, %v282, 0
        %341 = vmatprep.subr.bf16.mxu0 %v297
        %342 = vmatpush1.bf16.msra.mxu0 %v294
        %343 = vmatprep.subr.bf16.mxu0 0
        %344 = vmatpush1.bf16.msra.mxu0 0
        %345 = vmatprep.subr.bf16.mxu0 0
        %346 = vmatpush1.bf16.msra.mxu0 0
        %347 = vmatprep.subr.bf16.mxu0 0
        %348 = vmatpush1.bf16.msra.mxu0 0
        %349 = vmatprep.subr.bf16.mxu0 0
        %350 = vmatpush1.bf16.msra.mxu0 0
        %351 = vmatprep.subr.bf16.mxu0 0
        %352 = vmatpush1.bf16.msra.mxu0 0
        %353 = vmatprep.subr.bf16.mxu0 0
        %354 = vmatpush1.bf16.msra.mxu0 0
        %355 = vmatprep.subr.bf16.mxu0 0
        %356 = vmatpush1.bf16.msra.mxu0 0
        %357 = vmatprep.subr.bf16.mxu0 0
        %358 = vmatpush1.bf16.msra.mxu0 0
        %359 = vmatprep.subr.bf16.mxu0 0
        %360 = vmatpush1.bf16.msra.mxu0 0
        %361 = vmatprep.subr.bf16.mxu0 0
        %362 = vmatpush1.bf16.msra.mxu0 0
        %363 = vmatprep.subr.bf16.mxu0 0
        %364 = vmatpush1.bf16.msra.mxu0 0
        %365 = vmatprep.subr.bf16.mxu0 0
        %366 = vmatpush1.bf16.msra.mxu0 0
        %367 = vmatprep.subr.bf16.mxu0 0
        %368 = vmatpush1.bf16.msra.mxu0 0
        %369 = vmatprep.subr.bf16.mxu0 0
        %370 = vmatpush1.bf16.msra.mxu0 0
        %371 = vmatprep.subr.bf16.mxu0 0
        %372 = vmatpush1.bf16.msra.mxu0 0
        %373 = vmatprep.mubr.bf16.mxu0 0
        %374 = vmatmul.mubr.bf16.gmra.mrb[0].mxu0 %v290
        %v375 = vpop.f32.mrb[0].mxu0
        %v376 = vadd.f32 %v286, %v375
        %v377 = vpop.f32.mrb[0].mxu0
        %v378 = vadd.f32 %v286, %v377
        %v379 = vpop.f32.mrb[0].mxu0
        %v380 = vpop.f32.mrb[0].mxu0
        %381 = vdwg.mxu0
        %382 = vmatprep.subr.bf16.mxu0 %v303
        %383 = vmatpush1.bf16.msra.mxu0 %v300
        %384 = vmatprep.subr.bf16.mxu0 0
        %385 = vmatpush1.bf16.msra.mxu0 0
        %386 = vmatprep.subr.bf16.mxu0 0
        %387 = vmatpush1.bf16.msra.mxu0 0
        %388 = vmatprep.subr.bf16.mxu0 0
        %389 = vmatpush1.bf16.msra.mxu0 0
        %390 = vmatprep.subr.bf16.mxu0 0
        %391 = vmatpush1.bf16.msra.mxu0 0
        %392 = vmatprep.subr.bf16.mxu0 0
        %393 = vmatpush1.bf16.msra.mxu0 0
        %394 = vmatprep.subr.bf16.mxu0 0
        %395 = vmatpush1.bf16.msra.mxu0 0
        %396 = vmatprep.subr.bf16.mxu0 0
        %397 = vmatpush1.bf16.msra.mxu0 0
        %398 = vmatprep.subr.bf16.mxu0 0
        %399 = vmatpush1.bf16.msra.mxu0 0
        %400 = vmatprep.subr.bf16.mxu0 0
        %401 = vmatpush1.bf16.msra.mxu0 0
        %402 = vmatprep.subr.bf16.mxu0 0
        %403 = vmatpush1.bf16.msra.mxu0 0
        %404 = vmatprep.subr.bf16.mxu0 0
        %405 = vmatpush1.bf16.msra.mxu0 0
        %406 = vmatprep.subr.bf16.mxu0 0
        %407 = vmatpush1.bf16.msra.mxu0 0
        %408 = vmatprep.subr.bf16.mxu0 0
        %409 = vmatpush1.bf16.msra.mxu0 0
        %410 = vmatprep.subr.bf16.mxu0 0
        %411 = vmatpush1.bf16.msra.mxu0 0
        %412 = vmatprep.subr.bf16.mxu0 0
        %413 = vmatpush1.bf16.msra.mxu0 0
        %414 = vmatprep.mubr.bf16.mxu0 0
        %415 = vmatmul.mubr.bf16.gmra.mrb[0].mxu0 %v290
        %v416 = vpop.f32.mrb[0].mxu0
        %v417 = vadd.f32 %v286, %v416
        %v418 = vpop.f32.mrb[0].mxu0
        %v419 = vadd.f32 %v286, %v418
        %v420 = vpop.f32.mrb[0].mxu0
        %v421 = vpop.f32.mrb[0].mxu0
        %422 = vdwg.mxu0
        %423 = vmatprep.subr.bf16.mxu0 %v309
        %424 = vmatpush1.bf16.msra.mxu0 %v306
        %425 = vmatprep.subr.bf16.mxu0 0
        %426 = vmatpush1.bf16.msra.mxu0 0
        %427 = vmatprep.subr.bf16.mxu0 0
        %428 = vmatpush1.bf16.msra.mxu0 0
        %429 = vmatprep.subr.bf16.mxu0 0
        %430 = vmatpush1.bf16.msra.mxu0 0
        %431 = vmatprep.subr.bf16.mxu0 0
        %432 = vmatpush1.bf16.msra.mxu0 0
        %433 = vmatprep.subr.bf16.mxu0 0
        %434 = vmatpush1.bf16.msra.mxu0 0
        %435 = vmatprep.subr.bf16.mxu0 0
        %436 = vmatpush1.bf16.msra.mxu0 0
        %437 = vmatprep.subr.bf16.mxu0 0
        %438 = vmatpush1.bf16.msra.mxu0 0
        %439 = vmatprep.subr.bf16.mxu0 0
        %440 = vmatpush1.bf16.msra.mxu0 0
        %441 = vmatprep.subr.bf16.mxu0 0
        %442 = vmatpush1.bf16.msra.mxu0 0
        %443 = vmatprep.subr.bf16.mxu0 0
        %444 = vmatpush1.bf16.msra.mxu0 0
        %445 = vmatprep.subr.bf16.mxu0 0
        %446 = vmatpush1.bf16.msra.mxu0 0
        %447 = vmatprep.subr.bf16.mxu0 0
        %448 = vmatpush1.bf16.msra.mxu0 0
        %449 = vmatprep.subr.bf16.mxu0 0
        %450 = vmatpush1.bf16.msra.mxu0 0
        %451 = vmatprep.subr.bf16.mxu0 0
        %452 = vmatpush1.bf16.msra.mxu0 0
        %453 = vmatprep.subr.bf16.mxu0 0
        %454 = vmatpush1.bf16.msra.mxu0 0
        %455 = vmatprep.mubr.bf16.mxu0 0
        %456 = vmatmul.mubr.bf16.gmra.mrb[0].mxu0 %v290
        %v457 = vpop.f32.mrb[0].mxu0
        %v458 = vadd.f32 %v286, %v457
        %v459 = vpop.f32.mrb[0].mxu0
        %v460 = vadd.f32 %v286, %v459
        %v461 = vpop.f32.mrb[0].mxu0
        %v462 = vpop.f32.mrb[0].mxu0
        %463 = vdwg.mxu0
        %464 = vmatprep.subr.bf16.mxu0 %v315
        %465 = vmatpush1.bf16.msra.mxu0 %v312
        %466 = vmatprep.subr.bf16.mxu0 0
        %467 = vmatpush1.bf16.msra.mxu0 0
        %468 = vmatprep.subr.bf16.mxu0 0
        %469 = vmatpush1.bf16.msra.mxu0 0
        %470 = vmatprep.subr.bf16.mxu0 0
        %471 = vmatpush1.bf16.msra.mxu0 0
        %472 = vmatprep.subr.bf16.mxu0 0
        %473 = vmatpush1.bf16.msra.mxu0 0
        %474 = vmatprep.subr.bf16.mxu0 0
        %475 = vmatpush1.bf16.msra.mxu0 0
        %476 = vmatprep.subr.bf16.mxu0 0
        %477 = vmatpush1.bf16.msra.mxu0 0
        %478 = vmatprep.subr.bf16.mxu0 0
        %479 = vmatpush1.bf16.msra.mxu0 0
        %480 = vmatprep.subr.bf16.mxu0 0
        %481 = vmatpush1.bf16.msra.mxu0 0
        %482 = vmatprep.subr.bf16.mxu0 0
        %483 = vmatpush1.bf16.msra.mxu0 0
        %484 = vmatprep.subr.bf16.mxu0 0
        %485 = vmatpush1.bf16.msra.mxu0 0
        %486 = vmatprep.subr.bf16.mxu0 0
        %487 = vmatpush1.bf16.msra.mxu0 0
        %488 = vmatprep.subr.bf16.mxu0 0
        %489 = vmatpush1.bf16.msra.mxu0 0
        %490 = vmatprep.subr.bf16.mxu0 0
        %491 = vmatpush1.bf16.msra.mxu0 0
        %492 = vmatprep.subr.bf16.mxu0 0
        %493 = vmatpush1.bf16.msra.mxu0 0
        %494 = vmatprep.subr.bf16.mxu0 0
        %495 = vmatpush1.bf16.msra.mxu0 0
        %496 = vmatprep.mubr.bf16.mxu0 0
        %497 = vmatmul.mubr.bf16.gmra.mrb[0].mxu0 %v290
        %v498 = vpop.f32.mrb[0].mxu0
        %v499 = vadd.f32 %v286, %v498
        %v500 = vpop.f32.mrb[0].mxu0
        %v501 = vadd.f32 %v286, %v500
        %v502 = vpop.f32.mrb[0].mxu0
        %v503 = vpop.f32.mrb[0].mxu0
        %504 = vdwg.mxu0
        %505 = vmatprep.subr.bf16.mxu0 %v321
        %506 = vmatpush1.bf16.msra.mxu0 %v318
        %507 = vmatprep.subr.bf16.mxu0 0
        %508 = vmatpush1.bf16.msra.mxu0 0
        %509 = vmatprep.subr.bf16.mxu0 0
        %510 = vmatpush1.bf16.msra.mxu0 0
        %511 = vmatprep.subr.bf16.mxu0 0
        %512 = vmatpush1.bf16.msra.mxu0 0
        %513 = vmatprep.subr.bf16.mxu0 0
        %514 = vmatpush1.bf16.msra.mxu0 0
        %515 = vmatprep.subr.bf16.mxu0 0
        %516 = vmatpush1.bf16.msra.mxu0 0
        %517 = vmatprep.subr.bf16.mxu0 0
        %518 = vmatpush1.bf16.msra.mxu0 0
        %519 = vmatprep.subr.bf16.mxu0 0
        %520 = vmatpush1.bf16.msra.mxu0 0
        %521 = vmatprep.subr.bf16.mxu0 0
        %522 = vmatpush1.bf16.msra.mxu0 0
        %523 = vmatprep.subr.bf16.mxu0 0
        %524 = vmatpush1.bf16.msra.mxu0 0
        %525 = vmatprep.subr.bf16.mxu0 0
        %526 = vmatpush1.bf16.msra.mxu0 0
        %527 = vmatprep.subr.bf16.mxu0 0
        %528 = vmatpush1.bf16.msra.mxu0 0
        %529 = vmatprep.subr.bf16.mxu0 0
        %530 = vmatpush1.bf16.msra.mxu0 0
        %531 = vmatprep.subr.bf16.mxu0 0
        %532 = vmatpush1.bf16.msra.mxu0 0
        %533 = vmatprep.subr.bf16.mxu0 0
        %534 = vmatpush1.bf16.msra.mxu0 0
        %535 = vmatprep.subr.bf16.mxu0 0
        %536 = vmatpush1.bf16.msra.mxu0 0
        %537 = vmatprep.mubr.bf16.mxu0 0
        %538 = vmatmul.mubr.bf16.gmra.mrb[0].mxu0 %v290
        %v539 = vpop.f32.mrb[0].mxu0
        %v540 = vadd.f32 %v286, %v539
        %v541 = vpop.f32.mrb[0].mxu0
        %v542 = vadd.f32 %v286, %v541
        %v543 = vpop.f32.mrb[0].mxu0
        %v544 = vpop.f32.mrb[0].mxu0
        %545 = vdwg.mxu0
        %546 = vmatprep.subr.bf16.mxu0 %v327
        %547 = vmatpush1.bf16.msra.mxu0 %v324
        %548 = vmatprep.subr.bf16.mxu0 0
        %549 = vmatpush1.bf16.msra.mxu0 0
        %550 = vmatprep.subr.bf16.mxu0 0
        %551 = vmatpush1.bf16.msra.mxu0 0
        %552 = vmatprep.subr.bf16.mxu0 0
        %553 = vmatpush1.bf16.msra.mxu0 0
        %554 = vmatprep.subr.bf16.mxu0 0
        %555 = vmatpush1.bf16.msra.mxu0 0
        %556 = vmatprep.subr.bf16.mxu0 0
        %557 = vmatpush1.bf16.msra.mxu0 0
        %558 = vmatprep.subr.bf16.mxu0 0
        %559 = vmatpush1.bf16.msra.mxu0 0
        %560 = vmatprep.subr.bf16.mxu0 0
        %561 = vmatpush1.bf16.msra.mxu0 0
        %562 = vmatprep.subr.bf16.mxu0 0
        %563 = vmatpush1.bf16.msra.mxu0 0
        %564 = vmatprep.subr.bf16.mxu0 0
        %565 = vmatpush1.bf16.msra.mxu0 0
        %566 = vmatprep.subr.bf16.mxu0 0
        %567 = vmatpush1.bf16.msra.mxu0 0
        %568 = vmatprep.subr.bf16.mxu0 0
        %569 = vmatpush1.bf16.msra.mxu0 0
        %570 = vmatprep.subr.bf16.mxu0 0
        %571 = vmatpush1.bf16.msra.mxu0 0
        %572 = vmatprep.subr.bf16.mxu0 0
        %573 = vmatpush1.bf16.msra.mxu0 0
        %574 = vmatprep.subr.bf16.mxu0 0
        %575 = vmatpush1.bf16.msra.mxu0 0
        %576 = vmatprep.subr.bf16.mxu0 0
        %577 = vmatpush1.bf16.msra.mxu0 0
        %578 = vmatprep.mubr.bf16.mxu0 0
        %579 = vmatmul.mubr.bf16.gmra.mrb[0].mxu0 %v290
        %v580 = vpop.f32.mrb[0].mxu0
        %v581 = vadd.f32 %v286, %v580
        %v582 = vpop.f32.mrb[0].mxu0
        %v583 = vadd.f32 %v286, %v582
        %v584 = vpop.f32.mrb[0].mxu0
        %v585 = vpop.f32.mrb[0].mxu0
        %586 = vdwg.mxu0
        %587 = vmatprep.subr.bf16.mxu0 %v333
        %588 = vmatpush1.bf16.msra.mxu0 %v330
        %589 = vmatprep.subr.bf16.mxu0 0
        %590 = vmatpush1.bf16.msra.mxu0 0
        %591 = vmatprep.subr.bf16.mxu0 0
        %592 = vmatpush1.bf16.msra.mxu0 0
        %593 = vmatprep.subr.bf16.mxu0 0
        %594 = vmatpush1.bf16.msra.mxu0 0
        %595 = vmatprep.subr.bf16.mxu0 0
        %596 = vmatpush1.bf16.msra.mxu0 0
        %597 = vmatprep.subr.bf16.mxu0 0
        %598 = vmatpush1.bf16.msra.mxu0 0
        %599 = vmatprep.subr.bf16.mxu0 0
        %600 = vmatpush1.bf16.msra.mxu0 0
        %601 = vmatprep.subr.bf16.mxu0 0
        %602 = vmatpush1.bf16.msra.mxu0 0
        %603 = vmatprep.subr.bf16.mxu0 0
        %604 = vmatpush1.bf16.msra.mxu0 0
        %605 = vmatprep.subr.bf16.mxu0 0
        %606 = vmatpush1.bf16.msra.mxu0 0
        %607 = vmatprep.subr.bf16.mxu0 0
        %608 = vmatpush1.bf16.msra.mxu0 0
        %609 = vmatprep.subr.bf16.mxu0 0
        %610 = vmatpush1.bf16.msra.mxu0 0
        %611 = vmatprep.subr.bf16.mxu0 0
        %612 = vmatpush1.bf16.msra.mxu0 0
        %613 = vmatprep.subr.bf16.mxu0 0
        %614 = vmatpush1.bf16.msra.mxu0 0
        %615 = vmatprep.subr.bf16.mxu0 0
        %616 = vmatpush1.bf16.msra.mxu0 0
        %617 = vmatprep.subr.bf16.mxu0 0
        %618 = vmatpush1.bf16.msra.mxu0 0
        %619 = vmatprep.mubr.bf16.mxu0 0
        %620 = vmatmul.mubr.bf16.gmra.mrb[0].mxu0 %v290
        %v621 = vpop.f32.mrb[0].mxu0
        %v622 = vadd.f32 %v286, %v621
        %v623 = vpop.f32.mrb[0].mxu0
        %v624 = vadd.f32 %v286, %v623
        %v625 = vpop.f32.mrb[0].mxu0
        %v626 = vpop.f32.mrb[0].mxu0
        %627 = vdwg.mxu0
        %628 = vmatprep.subr.bf16.mxu0 %v339
        %629 = vmatpush1.bf16.msra.mxu0 %v336
        %630 = vmatprep.subr.bf16.mxu0 0
        %631 = vmatpush1.bf16.msra.mxu0 0
        %632 = vmatprep.subr.bf16.mxu0 0
        %633 = vmatpush1.bf16.msra.mxu0 0
        %634 = vmatprep.subr.bf16.mxu0 0
        %635 = vmatpush1.bf16.msra.mxu0 0
        %636 = vmatprep.subr.bf16.mxu0 0
        %637 = vmatpush1.bf16.msra.mxu0 0
        %638 = vmatprep.subr.bf16.mxu0 0
        %639 = vmatpush1.bf16.msra.mxu0 0
        %640 = vmatprep.subr.bf16.mxu0 0
        %641 = vmatpush1.bf16.msra.mxu0 0
        %642 = vmatprep.subr.bf16.mxu0 0
        %643 = vmatpush1.bf16.msra.mxu0 0
        %644 = vmatprep.subr.bf16.mxu0 0
        %645 = vmatpush1.bf16.msra.mxu0 0
        %646 = vmatprep.subr.bf16.mxu0 0
        %647 = vmatpush1.bf16.msra.mxu0 0
        %648 = vmatprep.subr.bf16.mxu0 0
        %649 = vmatpush1.bf16.msra.mxu0 0
        %650 = vmatprep.subr.bf16.mxu0 0
        %651 = vmatpush1.bf16.msra.mxu0 0
        %652 = vmatprep.subr.bf16.mxu0 0
        %653 = vmatpush1.bf16.msra.mxu0 0
        %654 = vmatprep.subr.bf16.mxu0 0
        %655 = vmatpush1.bf16.msra.mxu0 0
        %656 = vmatprep.subr.bf16.mxu0 0
        %657 = vmatpush1.bf16.msra.mxu0 0
        %658 = vmatprep.subr.bf16.mxu0 0
        %659 = vmatpush1.bf16.msra.mxu0 0
        %660 = vmatprep.mubr.bf16.mxu0 0
        %661 = vmatmul.mubr.bf16.gmra.mrb[0].mxu0 %v290
        %v662 = vpop.f32.mrb[0].mxu0
        %v663 = vadd.f32 %v286, %v662
        %v664 = vpop.f32.mrb[0].mxu0
        %v665 = vadd.f32 %v286, %v664
        %v666 = vpop.f32.mrb[0].mxu0
        %v667 = vpop.f32.mrb[0].mxu0
        %668 = vdwg.mxu0
        %v669 = vsel %vm292, %v376, 0.0
        %v670 = vsel %vm292, %v378, 0.0
        %v671 = vadd.f32 %v669, %v670
        %v672 = vsel %vm292, %v417, 0.0
        %v673 = vadd.f32 %v671, %v672
        %v674 = vsel %vm292, %v419, 0.0
        %v675 = vadd.f32 %v673, %v674
        %v676 = vsel %vm292, %v458, 0.0
        %v677 = vadd.f32 %v675, %v676
        %v678 = vsel %vm292, %v460, 0.0
        %v679 = vadd.f32 %v677, %v678
        %v680 = vsel %vm292, %v499, 0.0
        %v681 = vadd.f32 %v679, %v680
        %v682 = vsel %vm292, %v501, 0.0
        %v683 = vadd.f32 %v681, %v682
        %v684 = vsel %vm292, %v540, 0.0
        %v685 = vadd.f32 %v683, %v684
        %v686 = vsel %vm292, %v542, 0.0
        %v687 = vadd.f32 %v685, %v686
        %v688 = vsel %vm292, %v581, 0.0
        %v689 = vadd.f32 %v687, %v688
        %v690 = vsel %vm292, %v583, 0.0
        %v691 = vadd.f32 %v689, %v690
        %v692 = vsel %vm292, %v622, 0.0
        %v693 = vadd.f32 %v691, %v692
        %v694 = vsel %vm292, %v624, 0.0
        %v695 = vadd.f32 %v693, %v694
        %v696 = vsel %vm292, %v663, 0.0
        %v697 = vadd.f32 %v695, %v696
        %v698 = vsel %vm292, %v665, 0.0
        %v699 = vadd.f32 %v697, %v698
        %700 = vadd.xlane.f32.xlu0 %v699
        %v701 = vpop.xlane.xlu0 %700
        %v702 = vadd.f32 %v701, 0.0
        %v703 = vmul.f32 %v376, %v376
        %v704 = vmul.f32 %v378, %v378
        %v705 = vmul.f32 %v417, %v417
        %v706 = vmul.f32 %v419, %v419
        %v707 = vmul.f32 %v458, %v458
        %v708 = vmul.f32 %v460, %v460
        %v709 = vmul.f32 %v499, %v499
        %v710 = vmul.f32 %v501, %v501
        %v711 = vmul.f32 %v540, %v540
        %v712 = vmul.f32 %v542, %v542
        %v713 = vmul.f32 %v581, %v581
        %v714 = vmul.f32 %v583, %v583
        %v715 = vmul.f32 %v622, %v622
        %v716 = vmul.f32 %v624, %v624
        %v717 = vmul.f32 %v663, %v663
        %v718 = vmul.f32 %v665, %v665
        %v719 = vsel %vm292, %v703, 0.0
        %v720 = vsel %vm292, %v704, 0.0
        %v721 = vadd.f32 %v719, %v720
        %v722 = vsel %vm292, %v705, 0.0
        %v723 = vadd.f32 %v721, %v722
        %v724 = vsel %vm292, %v706, 0.0
        %v725 = vadd.f32 %v723, %v724
        %v726 = vsel %vm292, %v707, 0.0
        %v727 = vadd.f32 %v725, %v726
        %v728 = vsel %vm292, %v708, 0.0
        %v729 = vadd.f32 %v727, %v728
        %v730 = vsel %vm292, %v709, 0.0
        %v731 = vadd.f32 %v729, %v730
        %v732 = vsel %vm292, %v710, 0.0
        %v733 = vadd.f32 %v731, %v732
        %v734 = vsel %vm292, %v711, 0.0
        %v735 = vadd.f32 %v733, %v734
        %v736 = vsel %vm292, %v712, 0.0
        %v737 = vadd.f32 %v735, %v736
        %v738 = vsel %vm292, %v713, 0.0
        %v739 = vadd.f32 %v737, %v738
        %v740 = vsel %vm292, %v714, 0.0
        %v741 = vadd.f32 %v739, %v740
        %v742 = vsel %vm292, %v715, 0.0
        %v743 = vadd.f32 %v741, %v742
        %v744 = vsel %vm292, %v716, 0.0
        %v745 = vadd.f32 %v743, %v744
        %v746 = vsel %vm292, %v717, 0.0
        %v747 = vadd.f32 %v745, %v746
        %v748 = vsel %vm292, %v718, 0.0
        %v749 = vadd.f32 %v747, %v748
        %750 = vadd.xlane.f32.xlu0 %v749
        %v751 = vpop.xlane.xlu0 %750
        %v752 = vadd.f32 %v751, 0.0
        %v769 = vcombine.low %v376, %v378
        %v770 = vcombine.low %v417, %v419
        %v771 = vcombine.low %v458, %v460
        %v772 = vcombine.low %v499, %v501
        %v773 = vcombine.low %v540, %v542
        %v774 = vcombine.low %v581, %v583
        %v775 = vcombine.low %v622, %v624
        %v776 = vcombine.low %v663, %v665
        %s785 = sshra.s32 %s250, 7
        %s786 = sand.u32 %s250, 127
        %s787 = smul.addr %s785, 4
        %s788 = scalar_lea.vmem %s3, %s787
        %789 = vst [vmem:[%s788] sm:$0xff] %v769
        %790 = vst [vmem:[%s788 + $0x8] sm:$0xff] %v770
        %791 = vst [vmem:[%s788 + $0x10] sm:$0xff] %v771
        %792 = vst [vmem:[%s788 + $0x18] sm:$0xff] %v772
        %793 = vst [vmem:[%s788 + $0x20] sm:$0xff] %v773
        %794 = vst [vmem:[%s788 + $0x28] sm:$0xff] %v774
        %795 = vst [vmem:[%s788 + $0x30] sm:$0xff] %v775
        %796 = vst [vmem:[%s788 + $0x38] sm:$0xff] %v776
        %s797 = scalar_lea.vmem %s222, 128 [#allocation4]
        %v798 = vld [vmem:[%s797] sm:$0xff]
        %v799 = vld [vmem:[%s797 + $0x8] sm:$0xff]
        %v800 = vld [vmem:[%s797 + $0x10] sm:$0xff]
        %v801 = vld [vmem:[%s797 + $0x18] sm:$0xff]
        %v802 = vld [vmem:[%s797 + $0x20] sm:$0xff]
        %v803 = vld [vmem:[%s797 + $0x28] sm:$0xff]
        %v804 = vld [vmem:[%s797 + $0x30] sm:$0xff]
        %v805 = vld [vmem:[%s797 + $0x38] sm:$0xff]
        %v806 = vld [vmem:[%s797 + $0x40] sm:$0xff]
        %v807 = vld [vmem:[%s797 + $0x48] sm:$0xff]
        %v808 = vld [vmem:[%s797 + $0x50] sm:$0xff]
        %v809 = vld [vmem:[%s797 + $0x58] sm:$0xff]
        %v810 = vld [vmem:[%s797 + $0x60] sm:$0xff]
        %v811 = vld [vmem:[%s797 + $0x68] sm:$0xff]
        %v812 = vld [vmem:[%s797 + $0x70] sm:$0xff]
        %v813 = vld [vmem:[%s797 + $0x78] sm:$0xff]
        %v814 = vpack.c.bf16 %v798, %v798
        %v815 = vpack.c.bf16 %v799, %v799
        %v816 = vpack.c.bf16 %v800, %v800
        %v817 = vpack.c.bf16 %v801, %v801
        %v818 = vpack.c.bf16 %v802, %v802
        %v819 = vpack.c.bf16 %v803, %v803
        %v820 = vpack.c.bf16 %v804, %v804
        %v821 = vpack.c.bf16 %v805, %v805
        %v822 = vpack.c.bf16 %v806, %v806
        %v823 = vpack.c.bf16 %v807, %v807
        %v824 = vpack.c.bf16 %v808, %v808
        %v825 = vpack.c.bf16 %v809, %v809
        %v826 = vpack.c.bf16 %v810, %v810
        %v827 = vpack.c.bf16 %v811, %v811
        %v828 = vpack.c.bf16 %v812, %v812
        %v829 = vpack.c.bf16 %v813, %v813
        %v831 = vsel %vm292, %v814, 0
        %v834 = vsel %vm292, %v815, 0
        %v837 = vsel %vm292, %v816, 0
        %v840 = vsel %vm292, %v817, 0
        %v843 = vsel %vm292, %v818, 0
        %v846 = vsel %vm292, %v819, 0
        %v849 = vsel %vm292, %v820, 0
        %v852 = vsel %vm292, %v821, 0
        %v855 = vsel %vm292, %v822, 0
        %v858 = vsel %vm292, %v823, 0
        %v861 = vsel %vm292, %v824, 0
        %v864 = vsel %vm292, %v825, 0
        %v867 = vsel %vm292, %v826, 0
        %v870 = vsel %vm292, %v827, 0
        %v873 = vsel %vm292, %v828, 0
        %v876 = vsel %vm292, %v829, 0
        %878 = vmatprep.subr.bf16.mxu0 %v834
        %879 = vmatpush1.bf16.msra.mxu0 %v831
        %880 = vmatprep.subr.bf16.mxu0 0
        %881 = vmatpush1.bf16.msra.mxu0 0
        %882 = vmatprep.subr.bf16.mxu0 0
        %883 = vmatpush1.bf16.msra.mxu0 0
        %884 = vmatprep.subr.bf16.mxu0 0
        %885 = vmatpush1.bf16.msra.mxu0 0
        %886 = vmatprep.subr.bf16.mxu0 0
        %887 = vmatpush1.bf16.msra.mxu0 0
        %888 = vmatprep.subr.bf16.mxu0 0
        %889 = vmatpush1.bf16.msra.mxu0 0
        %890 = vmatprep.subr.bf16.mxu0 0
        %891 = vmatpush1.bf16.msra.mxu0 0
        %892 = vmatprep.subr.bf16.mxu0 0
        %893 = vmatpush1.bf16.msra.mxu0 0
        %894 = vmatprep.subr.bf16.mxu0 0
        %895 = vmatpush1.bf16.msra.mxu0 0
        %896 = vmatprep.subr.bf16.mxu0 0
        %897 = vmatpush1.bf16.msra.mxu0 0
        %898 = vmatprep.subr.bf16.mxu0 0
        %899 = vmatpush1.bf16.msra.mxu0 0
        %900 = vmatprep.subr.bf16.mxu0 0
        %901 = vmatpush1.bf16.msra.mxu0 0
        %902 = vmatprep.subr.bf16.mxu0 0
        %903 = vmatpush1.bf16.msra.mxu0 0
        %904 = vmatprep.subr.bf16.mxu0 0
        %905 = vmatpush1.bf16.msra.mxu0 0
        %906 = vmatprep.subr.bf16.mxu0 0
        %907 = vmatpush1.bf16.msra.mxu0 0
        %908 = vmatprep.subr.bf16.mxu0 0
        %909 = vmatpush1.bf16.msra.mxu0 0
        %910 = vmatprep.mubr.bf16.mxu0 0
        %911 = vmatmul.mubr.bf16.gmra.mrb[0].mxu0 %v290
        %v912 = vpop.f32.mrb[0].mxu0
        %v913 = vadd.f32 %v286, %v912
        %v914 = vpop.f32.mrb[0].mxu0
        %v915 = vadd.f32 %v286, %v914
        %v916 = vpop.f32.mrb[0].mxu0
        %v917 = vpop.f32.mrb[0].mxu0
        %918 = vdwg.mxu0
        %919 = vmatprep.subr.bf16.mxu0 %v840
        %920 = vmatpush1.bf16.msra.mxu0 %v837
        %921 = vmatprep.subr.bf16.mxu0 0
        %922 = vmatpush1.bf16.msra.mxu0 0
        %923 = vmatprep.subr.bf16.mxu0 0
        %924 = vmatpush1.bf16.msra.mxu0 0
        %925 = vmatprep.subr.bf16.mxu0 0
        %926 = vmatpush1.bf16.msra.mxu0 0
        %927 = vmatprep.subr.bf16.mxu0 0
        %928 = vmatpush1.bf16.msra.mxu0 0
        %929 = vmatprep.subr.bf16.mxu0 0
        %930 = vmatpush1.bf16.msra.mxu0 0
        %931 = vmatprep.subr.bf16.mxu0 0
        %932 = vmatpush1.bf16.msra.mxu0 0
        %933 = vmatprep.subr.bf16.mxu0 0
        %934 = vmatpush1.bf16.msra.mxu0 0
        %935 = vmatprep.subr.bf16.mxu0 0
        %936 = vmatpush1.bf16.msra.mxu0 0
        %937 = vmatprep.subr.bf16.mxu0 0
        %938 = vmatpush1.bf16.msra.mxu0 0
        %939 = vmatprep.subr.bf16.mxu0 0
        %940 = vmatpush1.bf16.msra.mxu0 0
        %941 = vmatprep.subr.bf16.mxu0 0
        %942 = vmatpush1.bf16.msra.mxu0 0
        %943 = vmatprep.subr.bf16.mxu0 0
        %944 = vmatpush1.bf16.msra.mxu0 0
        %945 = vmatprep.subr.bf16.mxu0 0
        %946 = vmatpush1.bf16.msra.mxu0 0
        %947 = vmatprep.subr.bf16.mxu0 0
        %948 = vmatpush1.bf16.msra.mxu0 0
        %949 = vmatprep.subr.bf16.mxu0 0
        %950 = vmatpush1.bf16.msra.mxu0 0
        %951 = vmatprep.mubr.bf16.mxu0 0
        %952 = vmatmul.mubr.bf16.gmra.mrb[0].mxu0 %v290
        %v953 = vpop.f32.mrb[0].mxu0
        %v954 = vadd.f32 %v286, %v953
        %v955 = vpop.f32.mrb[0].mxu0
        %v956 = vadd.f32 %v286, %v955
        %v957 = vpop.f32.mrb[0].mxu0
        %v958 = vpop.f32.mrb[0].mxu0
        %959 = vdwg.mxu0
        %960 = vmatprep.subr.bf16.mxu0 %v846
        %961 = vmatpush1.bf16.msra.mxu0 %v843
        %962 = vmatprep.subr.bf16.mxu0 0
        %963 = vmatpush1.bf16.msra.mxu0 0
        %964 = vmatprep.subr.bf16.mxu0 0
        %965 = vmatpush1.bf16.msra.mxu0 0
        %966 = vmatprep.subr.bf16.mxu0 0
        %967 = vmatpush1.bf16.msra.mxu0 0
        %968 = vmatprep.subr.bf16.mxu0 0
        %969 = vmatpush1.bf16.msra.mxu0 0
        %970 = vmatprep.subr.bf16.mxu0 0
        %971 = vmatpush1.bf16.msra.mxu0 0
        %972 = vmatprep.subr.bf16.mxu0 0
        %973 = vmatpush1.bf16.msra.mxu0 0
        %974 = vmatprep.subr.bf16.mxu0 0
        %975 = vmatpush1.bf16.msra.mxu0 0
        %976 = vmatprep.subr.bf16.mxu0 0
        %977 = vmatpush1.bf16.msra.mxu0 0
        %978 = vmatprep.subr.bf16.mxu0 0
        %979 = vmatpush1.bf16.msra.mxu0 0
        %980 = vmatprep.subr.bf16.mxu0 0
        %981 = vmatpush1.bf16.msra.mxu0 0
        %982 = vmatprep.subr.bf16.mxu0 0
        %983 = vmatpush1.bf16.msra.mxu0 0
        %984 = vmatprep.subr.bf16.mxu0 0
        %985 = vmatpush1.bf16.msra.mxu0 0
        %986 = vmatprep.subr.bf16.mxu0 0
        %987 = vmatpush1.bf16.msra.mxu0 0
        %988 = vmatprep.subr.bf16.mxu0 0
        %989 = vmatpush1.bf16.msra.mxu0 0
        %990 = vmatprep.subr.bf16.mxu0 0
        %991 = vmatpush1.bf16.msra.mxu0 0
        %992 = vmatprep.mubr.bf16.mxu0 0
        %993 = vmatmul.mubr.bf16.gmra.mrb[0].mxu0 %v290
        %v994 = vpop.f32.mrb[0].mxu0
        %v995 = vadd.f32 %v286, %v994
        %v996 = vpop.f32.mrb[0].mxu0
        %v997 = vadd.f32 %v286, %v996
        %v998 = vpop.f32.mrb[0].mxu0
        %v999 = vpop.f32.mrb[0].mxu0
        %1000 = vdwg.mxu0
        %1001 = vmatprep.subr.bf16.mxu0 %v852
        %1002 = vmatpush1.bf16.msra.mxu0 %v849
        %1003 = vmatprep.subr.bf16.mxu0 0
        %1004 = vmatpush1.bf16.msra.mxu0 0
        %1005 = vmatprep.subr.bf16.mxu0 0
        %1006 = vmatpush1.bf16.msra.mxu0 0
        %1007 = vmatprep.subr.bf16.mxu0 0
        %1008 = vmatpush1.bf16.msra.mxu0 0
        %1009 = vmatprep.subr.bf16.mxu0 0
        %1010 = vmatpush1.bf16.msra.mxu0 0
        %1011 = vmatprep.subr.bf16.mxu0 0
        %1012 = vmatpush1.bf16.msra.mxu0 0
        %1013 = vmatprep.subr.bf16.mxu0 0
        %1014 = vmatpush1.bf16.msra.mxu0 0
        %1015 = vmatprep.subr.bf16.mxu0 0
        %1016 = vmatpush1.bf16.msra.mxu0 0
        %1017 = vmatprep.subr.bf16.mxu0 0
        %1018 = vmatpush1.bf16.msra.mxu0 0
        %1019 = vmatprep.subr.bf16.mxu0 0
        %1020 = vmatpush1.bf16.msra.mxu0 0
        %1021 = vmatprep.subr.bf16.mxu0 0
        %1022 = vmatpush1.bf16.msra.mxu0 0
        %1023 = vmatprep.subr.bf16.mxu0 0
        %1024 = vmatpush1.bf16.msra.mxu0 0
        %1025 = vmatprep.subr.bf16.mxu0 0
        %1026 = vmatpush1.bf16.msra.mxu0 0
        %1027 = vmatprep.subr.bf16.mxu0 0
        %1028 = vmatpush1.bf16.msra.mxu0 0
        %1029 = vmatprep.subr.bf16.mxu0 0
        %1030 = vmatpush1.bf16.msra.mxu0 0
        %1031 = vmatprep.subr.bf16.mxu0 0
        %1032 = vmatpush1.bf16.msra.mxu0 0
        %1033 = vmatprep.mubr.bf16.mxu0 0
        %1034 = vmatmul.mubr.bf16.gmra.mrb[0].mxu0 %v290
        %v1035 = vpop.f32.mrb[0].mxu0
        %v1036 = vadd.f32 %v286, %v1035
        %v1037 = vpop.f32.mrb[0].mxu0
        %v1038 = vadd.f32 %v286, %v1037
        %v1039 = vpop.f32.mrb[0].mxu0
        %v1040 = vpop.f32.mrb[0].mxu0
        %1041 = vdwg.mxu0
        %1042 = vmatprep.subr.bf16.mxu0 %v858
        %1043 = vmatpush1.bf16.msra.mxu0 %v855
        %1044 = vmatprep.subr.bf16.mxu0 0
        %1045 = vmatpush1.bf16.msra.mxu0 0
        %1046 = vmatprep.subr.bf16.mxu0 0
        %1047 = vmatpush1.bf16.msra.mxu0 0
        %1048 = vmatprep.subr.bf16.mxu0 0
        %1049 = vmatpush1.bf16.msra.mxu0 0
        %1050 = vmatprep.subr.bf16.mxu0 0
        %1051 = vmatpush1.bf16.msra.mxu0 0
        %1052 = vmatprep.subr.bf16.mxu0 0
        %1053 = vmatpush1.bf16.msra.mxu0 0
        %1054 = vmatprep.subr.bf16.mxu0 0
        %1055 = vmatpush1.bf16.msra.mxu0 0
        %1056 = vmatprep.subr.bf16.mxu0 0
        %1057 = vmatpush1.bf16.msra.mxu0 0
        %1058 = vmatprep.subr.bf16.mxu0 0
        %1059 = vmatpush1.bf16.msra.mxu0 0
        %1060 = vmatprep.subr.bf16.mxu0 0
        %1061 = vmatpush1.bf16.msra.mxu0 0
        %1062 = vmatprep.subr.bf16.mxu0 0
        %1063 = vmatpush1.bf16.msra.mxu0 0
        %1064 = vmatprep.subr.bf16.mxu0 0
        %1065 = vmatpush1.bf16.msra.mxu0 0
        %1066 = vmatprep.subr.bf16.mxu0 0
        %1067 = vmatpush1.bf16.msra.mxu0 0
        %1068 = vmatprep.subr.bf16.mxu0 0
        %1069 = vmatpush1.bf16.msra.mxu0 0
        %1070 = vmatprep.subr.bf16.mxu0 0
        %1071 = vmatpush1.bf16.msra.mxu0 0
        %1072 = vmatprep.subr.bf16.mxu0 0
        %1073 = vmatpush1.bf16.msra.mxu0 0
        %1074 = vmatprep.mubr.bf16.mxu0 0
        %1075 = vmatmul.mubr.bf16.gmra.mrb[0].mxu0 %v290
        %v1076 = vpop.f32.mrb[0].mxu0
        %v1077 = vadd.f32 %v286, %v1076
        %v1078 = vpop.f32.mrb[0].mxu0
        %v1079 = vadd.f32 %v286, %v1078
        %v1080 = vpop.f32.mrb[0].mxu0
        %v1081 = vpop.f32.mrb[0].mxu0
        %1082 = vdwg.mxu0
        %1083 = vmatprep.subr.bf16.mxu0 %v864
        %1084 = vmatpush1.bf16.msra.mxu0 %v861
        %1085 = vmatprep.subr.bf16.mxu0 0
        %1086 = vmatpush1.bf16.msra.mxu0 0
        %1087 = vmatprep.subr.bf16.mxu0 0
        %1088 = vmatpush1.bf16.msra.mxu0 0
        %1089 = vmatprep.subr.bf16.mxu0 0
        %1090 = vmatpush1.bf16.msra.mxu0 0
        %1091 = vmatprep.subr.bf16.mxu0 0
        %1092 = vmatpush1.bf16.msra.mxu0 0
        %1093 = vmatprep.subr.bf16.mxu0 0
        %1094 = vmatpush1.bf16.msra.mxu0 0
        %1095 = vmatprep.subr.bf16.mxu0 0
        %1096 = vmatpush1.bf16.msra.mxu0 0
        %1097 = vmatprep.subr.bf16.mxu0 0
        %1098 = vmatpush1.bf16.msra.mxu0 0
        %1099 = vmatprep.subr.bf16.mxu0 0
        %1100 = vmatpush1.bf16.msra.mxu0 0
        %1101 = vmatprep.subr.bf16.mxu0 0
        %1102 = vmatpush1.bf16.msra.mxu0 0
        %1103 = vmatprep.subr.bf16.mxu0 0
        %1104 = vmatpush1.bf16.msra.mxu0 0
        %1105 = vmatprep.subr.bf16.mxu0 0
        %1106 = vmatpush1.bf16.msra.mxu0 0
        %1107 = vmatprep.subr.bf16.mxu0 0
        %1108 = vmatpush1.bf16.msra.mxu0 0
        %1109 = vmatprep.subr.bf16.mxu0 0
        %1110 = vmatpush1.bf16.msra.mxu0 0
        %1111 = vmatprep.subr.bf16.mxu0 0
        %1112 = vmatpush1.bf16.msra.mxu0 0
        %1113 = vmatprep.subr.bf16.mxu0 0
        %1114 = vmatpush1.bf16.msra.mxu0 0
        %1115 = vmatprep.mubr.bf16.mxu0 0
        %1116 = vmatmul.mubr.bf16.gmra.mrb[0].mxu0 %v290
        %v1117 = vpop.f32.mrb[0].mxu0
        %v1118 = vadd.f32 %v286, %v1117
        %v1119 = vpop.f32.mrb[0].mxu0
        %v1120 = vadd.f32 %v286, %v1119
        %v1121 = vpop.f32.mrb[0].mxu0
        %v1122 = vpop.f32.mrb[0].mxu0
        %1123 = vdwg.mxu0
        %1124 = vmatprep.subr.bf16.mxu0 %v870
        %1125 = vmatpush1.bf16.msra.mxu0 %v867
        %1126 = vmatprep.subr.bf16.mxu0 0
        %1127 = vmatpush1.bf16.msra.mxu0 0
        %1128 = vmatprep.subr.bf16.mxu0 0
        %1129 = vmatpush1.bf16.msra.mxu0 0
        %1130 = vmatprep.subr.bf16.mxu0 0
        %1131 = vmatpush1.bf16.msra.mxu0 0
        %1132 = vmatprep.subr.bf16.mxu0 0
        %1133 = vmatpush1.bf16.msra.mxu0 0
        %1134 = vmatprep.subr.bf16.mxu0 0
        %1135 = vmatpush1.bf16.msra.mxu0 0
        %1136 = vmatprep.subr.bf16.mxu0 0
        %1137 = vmatpush1.bf16.msra.mxu0 0
        %1138 = vmatprep.subr.bf16.mxu0 0
        %1139 = vmatpush1.bf16.msra.mxu0 0
        %1140 = vmatprep.subr.bf16.mxu0 0
        %1141 = vmatpush1.bf16.msra.mxu0 0
        %1142 = vmatprep.subr.bf16.mxu0 0
        %1143 = vmatpush1.bf16.msra.mxu0 0
        %1144 = vmatprep.subr.bf16.mxu0 0
        %1145 = vmatpush1.bf16.msra.mxu0 0
        %1146 = vmatprep.subr.bf16.mxu0 0
        %1147 = vmatpush1.bf16.msra.mxu0 0
        %1148 = vmatprep.subr.bf16.mxu0 0
        %1149 = vmatpush1.bf16.msra.mxu0 0
        %1150 = vmatprep.subr.bf16.mxu0 0
        %1151 = vmatpush1.bf16.msra.mxu0 0
        %1152 = vmatprep.subr.bf16.mxu0 0
        %1153 = vmatpush1.bf16.msra.mxu0 0
        %1154 = vmatprep.subr.bf16.mxu0 0
        %1155 = vmatpush1.bf16.msra.mxu0 0
        %1156 = vmatprep.mubr.bf16.mxu0 0
        %1157 = vmatmul.mubr.bf16.gmra.mrb[0].mxu0 %v290
        %v1158 = vpop.f32.mrb[0].mxu0
        %v1159 = vadd.f32 %v286, %v1158
        %v1160 = vpop.f32.mrb[0].mxu0
        %v1161 = vadd.f32 %v286, %v1160
        %v1162 = vpop.f32.mrb[0].mxu0
        %v1163 = vpop.f32.mrb[0].mxu0
        %1164 = vdwg.mxu0
        %1165 = vmatprep.subr.bf16.mxu0 %v876
        %1166 = vmatpush1.bf16.msra.mxu0 %v873
        %1167 = vmatprep.subr.bf16.mxu0 0
        %1168 = vmatpush1.bf16.msra.mxu0 0
        %1169 = vmatprep.subr.bf16.mxu0 0
        %1170 = vmatpush1.bf16.msra.mxu0 0
        %1171 = vmatprep.subr.bf16.mxu0 0
        %1172 = vmatpush1.bf16.msra.mxu0 0
        %1173 = vmatprep.subr.bf16.mxu0 0
        %1174 = vmatpush1.bf16.msra.mxu0 0
        %1175 = vmatprep.subr.bf16.mxu0 0
        %1176 = vmatpush1.bf16.msra.mxu0 0
        %1177 = vmatprep.subr.bf16.mxu0 0
        %1178 = vmatpush1.bf16.msra.mxu0 0
        %1179 = vmatprep.subr.bf16.mxu0 0
        %1180 = vmatpush1.bf16.msra.mxu0 0
        %1181 = vmatprep.subr.bf16.mxu0 0
        %1182 = vmatpush1.bf16.msra.mxu0 0
        %1183 = vmatprep.subr.bf16.mxu0 0
        %1184 = vmatpush1.bf16.msra.mxu0 0
        %1185 = vmatprep.subr.bf16.mxu0 0
        %1186 = vmatpush1.bf16.msra.mxu0 0
        %1187 = vmatprep.subr.bf16.mxu0 0
        %1188 = vmatpush1.bf16.msra.mxu0 0
        %1189 = vmatprep.subr.bf16.mxu0 0
        %1190 = vmatpush1.bf16.msra.mxu0 0
        %1191 = vmatprep.subr.bf16.mxu0 0
        %1192 = vmatpush1.bf16.msra.mxu0 0
        %1193 = vmatprep.subr.bf16.mxu0 0
        %1194 = vmatpush1.bf16.msra.mxu0 0
        %1195 = vmatprep.subr.bf16.mxu0 0
        %1196 = vmatpush1.bf16.msra.mxu0 0
        %1197 = vmatprep.mubr.bf16.mxu0 0
        %1198 = vmatmul.mubr.bf16.gmra.mrb[0].mxu0 %v290
        %v1199 = vpop.f32.mrb[0].mxu0
        %v1200 = vadd.f32 %v286, %v1199
        %v1201 = vpop.f32.mrb[0].mxu0
        %v1202 = vadd.f32 %v286, %v1201
        %v1203 = vpop.f32.mrb[0].mxu0
        %v1204 = vpop.f32.mrb[0].mxu0
        %1205 = vdwg.mxu0
        %v1206 = vsel %vm292, %v913, 0.0
        %v1207 = vsel %vm292, %v915, 0.0
        %v1208 = vadd.f32 %v1206, %v1207
        %v1209 = vsel %vm292, %v954, 0.0
        %v1210 = vadd.f32 %v1208, %v1209
        %v1211 = vsel %vm292, %v956, 0.0
        %v1212 = vadd.f32 %v1210, %v1211
        %v1213 = vsel %vm292, %v995, 0.0
        %v1214 = vadd.f32 %v1212, %v1213
        %v1215 = vsel %vm292, %v997, 0.0
        %v1216 = vadd.f32 %v1214, %v1215
        %v1217 = vsel %vm292, %v1036, 0.0
        %v1218 = vadd.f32 %v1216, %v1217
        %v1219 = vsel %vm292, %v1038, 0.0
        %v1220 = vadd.f32 %v1218, %v1219
        %v1221 = vsel %vm292, %v1077, 0.0
        %v1222 = vadd.f32 %v1220, %v1221
        %v1223 = vsel %vm292, %v1079, 0.0
        %v1224 = vadd.f32 %v1222, %v1223
        %v1225 = vsel %vm292, %v1118, 0.0
        %v1226 = vadd.f32 %v1224, %v1225
        %v1227 = vsel %vm292, %v1120, 0.0
        %v1228 = vadd.f32 %v1226, %v1227
        %v1229 = vsel %vm292, %v1159, 0.0
        %v1230 = vadd.f32 %v1228, %v1229
        %v1231 = vsel %vm292, %v1161, 0.0
        %v1232 = vadd.f32 %v1230, %v1231
        %v1233 = vsel %vm292, %v1200, 0.0
        %v1234 = vadd.f32 %v1232, %v1233
        %v1235 = vsel %vm292, %v1202, 0.0
        %v1236 = vadd.f32 %v1234, %v1235
        %1237 = vadd.xlane.f32.xlu0 %v1236
        %v1238 = vpop.xlane.xlu0 %1237
        %v1239 = vadd.f32 %v702, %v1238
        %v1240 = vmul.f32 %v913, %v913
        %v1241 = vmul.f32 %v915, %v915
        %v1242 = vmul.f32 %v954, %v954
        %v1243 = vmul.f32 %v956, %v956
        %v1244 = vmul.f32 %v995, %v995
        %v1245 = vmul.f32 %v997, %v997
        %v1246 = vmul.f32 %v1036, %v1036
        %v1247 = vmul.f32 %v1038, %v1038
        %v1248 = vmul.f32 %v1077, %v1077
        %v1249 = vmul.f32 %v1079, %v1079
        %v1250 = vmul.f32 %v1118, %v1118
        %v1251 = vmul.f32 %v1120, %v1120
        %v1252 = vmul.f32 %v1159, %v1159
        %v1253 = vmul.f32 %v1161, %v1161
        %v1254 = vmul.f32 %v1200, %v1200
        %v1255 = vmul.f32 %v1202, %v1202
        %v1256 = vsel %vm292, %v1240, 0.0
        %v1257 = vsel %vm292, %v1241, 0.0
        %v1258 = vadd.f32 %v1256, %v1257
        %v1259 = vsel %vm292, %v1242, 0.0
        %v1260 = vadd.f32 %v1258, %v1259
        %v1261 = vsel %vm292, %v1243, 0.0
        %v1262 = vadd.f32 %v1260, %v1261
        %v1263 = vsel %vm292, %v1244, 0.0
        %v1264 = vadd.f32 %v1262, %v1263
        %v1265 = vsel %vm292, %v1245, 0.0
        %v1266 = vadd.f32 %v1264, %v1265
        %v1267 = vsel %vm292, %v1246, 0.0
        %v1268 = vadd.f32 %v1266, %v1267
        %v1269 = vsel %vm292, %v1247, 0.0
        %v1270 = vadd.f32 %v1268, %v1269
        %v1271 = vsel %vm292, %v1248, 0.0
        %v1272 = vadd.f32 %v1270, %v1271
        %v1273 = vsel %vm292, %v1249, 0.0
        %v1274 = vadd.f32 %v1272, %v1273
        %v1275 = vsel %vm292, %v1250, 0.0
        %v1276 = vadd.f32 %v1274, %v1275
        %v1277 = vsel %vm292, %v1251, 0.0
        %v1278 = vadd.f32 %v1276, %v1277
        %v1279 = vsel %vm292, %v1252, 0.0
        %v1280 = vadd.f32 %v1278, %v1279
        %v1281 = vsel %vm292, %v1253, 0.0
        %v1282 = vadd.f32 %v1280, %v1281
        %v1283 = vsel %vm292, %v1254, 0.0
        %v1284 = vadd.f32 %v1282, %v1283
        %v1285 = vsel %vm292, %v1255, 0.0
        %v1286 = vadd.f32 %v1284, %v1285
        %1287 = vadd.xlane.f32.xlu0 %v1286
        %v1288 = vpop.xlane.xlu0 %1287
        %v1289 = vadd.f32 %v752, %v1288
        %v1306 = vcombine.low %v913, %v915
        %v1307 = vcombine.low %v954, %v956
        %v1308 = vcombine.low %v995, %v997
        %v1309 = vcombine.low %v1036, %v1038
        %v1310 = vcombine.low %v1077, %v1079
        %v1311 = vcombine.low %v1118, %v1120
        %v1312 = vcombine.low %v1159, %v1161
        %v1313 = vcombine.low %v1200, %v1202
        %s1322 = sadd.s32 %s785, 32
        %s1323 = smul.addr %s1322, 4
        %s1324 = scalar_lea.vmem %s3, %s1323
        %1325 = vst [vmem:[%s1324] sm:$0xff] %v1306
        %1326 = vst [vmem:[%s1324 + $0x8] sm:$0xff] %v1307
        %1327 = vst [vmem:[%s1324 + $0x10] sm:$0xff] %v1308
        %1328 = vst [vmem:[%s1324 + $0x18] sm:$0xff] %v1309
        %1329 = vst [vmem:[%s1324 + $0x20] sm:$0xff] %v1310
        %1330 = vst [vmem:[%s1324 + $0x28] sm:$0xff] %v1311
        %1331 = vst [vmem:[%s1324 + $0x30] sm:$0xff] %v1312
        %1332 = vst [vmem:[%s1324 + $0x38] sm:$0xff] %v1313
        %v1333 = vld [vmem:[#allocation2] sm:$0xf]
        %v1334 = vadd.f32 %v1333, %v1239
        %vm1335 = vcmask 3072
        %1336 = vst.msk [vmem:[#allocation2] sm:$0xf] %vm1335, %v1334
        %v1337 = vld [vmem:[#allocation3] sm:$0xf]
        %v1338 = vadd.f32 %v1337, %v1289
        %1339 = vst.msk [vmem:[#allocation3] sm:$0xf] %vm1335, %v1338
        %p1340 = scmp.eq.s32.totalorder %s14, 1
        // Predicated region
        $region60: #{net_out_single_block_forward.1} parent=50 // pred_check
          %p1341 = pneg %p1340
        $region61: #{net_out_single_block_forward.1} parent=50 // pred_check_branch
          %1343 = sbr.rel (%p1341) target = $region63
        $region62: #{net_out_single_block_forward.1} parent=50 // pred_region
          %v1344 = vld [vmem:[%s1] sm:$0xf]
          %v1345 = vld [vmem:[#allocation2] sm:$0xf]
          %v1346 = vmul.f32 %v1345, 0.00012207031
          %v1347 = vld [vmem:[#allocation3] sm:$0xf]
          %v1348 = vmul.f32 %v1347, 0.00012207031
          %v1349 = vmul.f32 %v1346, %v1346
          %v1350 = vsub.f32 %v1348, %v1349
          %v1351 = vadd.f32 %v1350, 1e-05
          %v1352 = vrsqrt.pop %v1351
          %1354 = vrot.lane.b32.xlu0 %v1352, 1
          %v1355 = vpop.permute.xlu0 %1354
          %v1357 = vmul.f32 %v1344, %v1355
          %1359 = vrot.lane.b32.xlu0 %v1357, 127
          %v1360 = vpop.permute.xlu0 %1359
          %v1362 = vmul.f32 %v1346, %v1360
          %1364 = vrot.lane.b32.xlu0 %v1362, 2
          %v1365 = vpop.permute.xlu0 %1364
          %v1367 = vsub.f32 %v1344, %v1365
          %v1368 = vld [vmem:[%s3] sm:$0xff]
          %v1369 = vld [vmem:[%s3 + $0x8] sm:$0xff]
          %v1370 = vld [vmem:[%s3 + $0x10] sm:$0xff]
          %v1371 = vld [vmem:[%s3 + $0x18] sm:$0xff]
          %v1372 = vld [vmem:[%s3 + $0x20] sm:$0xff]
          %v1373 = vld [vmem:[%s3 + $0x28] sm:$0xff]
          %v1374 = vld [vmem:[%s3 + $0x30] sm:$0xff]
          %v1375 = vld [vmem:[%s3 + $0x38] sm:$0xff]
          %v1376 = vld [vmem:[%s3 + $0x40] sm:$0xff]
          %v1377 = vld [vmem:[%s3 + $0x48] sm:$0xff]
          %v1378 = vld [vmem:[%s3 + $0x50] sm:$0xff]
          %v1379 = vld [vmem:[%s3 + $0x58] sm:$0xff]
          %v1380 = vld [vmem:[%s3 + $0x60] sm:$0xff]
          %v1381 = vld [vmem:[%s3 + $0x68] sm:$0xff]
          %v1382 = vld [vmem:[%s3 + $0x70] sm:$0xff]
          %v1383 = vld [vmem:[%s3 + $0x78] sm:$0xff]
          %v1384 = vld [vmem:[%s3 + $0x80] sm:$0xff]
          %v1385 = vld [vmem:[%s3 + $0x88] sm:$0xff]
          %v1386 = vld [vmem:[%s3 + $0x90] sm:$0xff]
          %v1387 = vld [vmem:[%s3 + $0x98] sm:$0xff]
          %v1388 = vld [vmem:[%s3 + $0xa0] sm:$0xff]
          %v1389 = vld [vmem:[%s3 + $0xa8] sm:$0xff]
          %v1390 = vld [vmem:[%s3 + $0xb0] sm:$0xff]
          %v1391 = vld [vmem:[%s3 + $0xb8] sm:$0xff]
          %v1392 = vld [vmem:[%s3 + $0xc0] sm:$0xff]
          %v1393 = vld [vmem:[%s3 + $0xc8] sm:$0xff]
          %v1394 = vld [vmem:[%s3 + $0xd0] sm:$0xff]
          %v1395 = vld [vmem:[%s3 + $0xd8] sm:$0xff]
          %v1396 = vld [vmem:[%s3 + $0xe0] sm:$0xff]
          %v1397 = vld [vmem:[%s3 + $0xe8] sm:$0xff]
          %v1398 = vld [vmem:[%s3 + $0xf0] sm:$0xff]
          %v1399 = vld [vmem:[%s3 + $0xf8] sm:$0xff]
          %1400 = vset.pattern.permute.xlu0 1
          %1401 = vperm.xlu0 %1400, %v1357
          %v1402 = vpop.permute.xlu0 %1401
          %v1404 = vunpack.c.l.s4 839922192
          %v1405 = vunpack.c.0.s8 %v1404
          %v1406 = vlaneseq
          %v1407 = vshrl.u32 %v1406, 7
          %v1408 = vsub.s32 %v1405, %v1407
          %v1409 = vrot.slane %v1402, %v1408
          %v1411 = vmul.f32 %v1368, %v1409
          %v1412 = vmul.f32 %v1369, %v1409
          %v1413 = vmul.f32 %v1370, %v1409
          %v1414 = vmul.f32 %v1371, %v1409
          %v1415 = vmul.f32 %v1372, %v1409
          %v1416 = vmul.f32 %v1373, %v1409
          %v1417 = vmul.f32 %v1374, %v1409
          %v1418 = vmul.f32 %v1375, %v1409
          %v1419 = vmul.f32 %v1376, %v1409
          %v1420 = vmul.f32 %v1377, %v1409
          %v1421 = vmul.f32 %v1378, %v1409
          %v1422 = vmul.f32 %v1379, %v1409
          %v1423 = vmul.f32 %v1380, %v1409
          %v1424 = vmul.f32 %v1381, %v1409
          %v1425 = vmul.f32 %v1382, %v1409
          %v1426 = vmul.f32 %v1383, %v1409
          %v1427 = vmul.f32 %v1384, %v1409
          %v1428 = vmul.f32 %v1385, %v1409
          %v1429 = vmul.f32 %v1386, %v1409
          %v1430 = vmul.f32 %v1387, %v1409
          %v1431 = vmul.f32 %v1388, %v1409
          %v1432 = vmul.f32 %v1389, %v1409
          %v1433 = vmul.f32 %v1390, %v1409
          %v1434 = vmul.f32 %v1391, %v1409
          %v1435 = vmul.f32 %v1392, %v1409
          %v1436 = vmul.f32 %v1393, %v1409
          %v1437 = vmul.f32 %v1394, %v1409
          %v1438 = vmul.f32 %v1395, %v1409
          %v1439 = vmul.f32 %v1396, %v1409
          %v1440 = vmul.f32 %v1397, %v1409
          %v1441 = vmul.f32 %v1398, %v1409
          %v1442 = vmul.f32 %v1399, %v1409
          %1444 = vset.pattern.permute.xlu0 2
          %1445 = vperm.xlu0 %1444, %v1367
          %v1446 = vpop.permute.xlu0 %1445
          %v1448 = vunpack.c.l.s4 839922192
          %v1449 = vunpack.c.0.s8 %v1448
          %v1450 = vlaneseq
          %v1451 = vshrl.u32 %v1450, 7
          %v1452 = vsub.s32 %v1449, %v1451
          %v1453 = vrot.slane %v1446, %v1452
          %v1455 = vadd.f32 %v1411, %v1453
          %v1456 = vadd.f32 %v1412, %v1453
          %v1457 = vadd.f32 %v1413, %v1453
          %v1458 = vadd.f32 %v1414, %v1453
          %v1459 = vadd.f32 %v1415, %v1453
          %v1460 = vadd.f32 %v1416, %v1453
          %v1461 = vadd.f32 %v1417, %v1453
          %v1462 = vadd.f32 %v1418, %v1453
          %v1463 = vadd.f32 %v1419, %v1453
          %v1464 = vadd.f32 %v1420, %v1453
          %v1465 = vadd.f32 %v1421, %v1453
          %v1466 = vadd.f32 %v1422, %v1453
          %v1467 = vadd.f32 %v1423, %v1453
          %v1468 = vadd.f32 %v1424, %v1453
          %v1469 = vadd.f32 %v1425, %v1453
          %v1470 = vadd.f32 %v1426, %v1453
          %v1471 = vadd.f32 %v1427, %v1453
          %v1472 = vadd.f32 %v1428, %v1453
          %v1473 = vadd.f32 %v1429, %v1453
          %v1474 = vadd.f32 %v1430, %v1453
          %v1475 = vadd.f32 %v1431, %v1453
          %v1476 = vadd.f32 %v1432, %v1453
          %v1477 = vadd.f32 %v1433, %v1453
          %v1478 = vadd.f32 %v1434, %v1453
          %v1479 = vadd.f32 %v1435, %v1453
          %v1480 = vadd.f32 %v1436, %v1453
          %v1481 = vadd.f32 %v1437, %v1453
          %v1482 = vadd.f32 %v1438, %v1453
          %v1483 = vadd.f32 %v1439, %v1453
          %v1484 = vadd.f32 %v1440, %v1453
          %v1485 = vadd.f32 %v1441, %v1453
          %v1486 = vadd.f32 %v1442, %v1453
          %vm1487 = vcmp.gt.f32.partialorder %v1455, 0.0
          %vm1488 = vcmp.gt.f32.partialorder %v1456, 0.0
          %vm1489 = vcmp.gt.f32.partialorder %v1457, 0.0
          %vm1490 = vcmp.gt.f32.partialorder %v1458, 0.0
          %vm1491 = vcmp.gt.f32.partialorder %v1459, 0.0
          %vm1492 = vcmp.gt.f32.partialorder %v1460, 0.0
          %vm1493 = vcmp.gt.f32.partialorder %v1461, 0.0
          %vm1494 = vcmp.gt.f32.partialorder %v1462, 0.0
          %vm1495 = vcmp.gt.f32.partialorder %v1463, 0.0
          %vm1496 = vcmp.gt.f32.partialorder %v1464, 0.0
          %vm1497 = vcmp.gt.f32.partialorder %v1465, 0.0
          %vm1498 = vcmp.gt.f32.partialorder %v1466, 0.0
          %vm1499 = vcmp.gt.f32.partialorder %v1467, 0.0
          %vm1500 = vcmp.gt.f32.partialorder %v1468, 0.0
          %vm1501 = vcmp.gt.f32.partialorder %v1469, 0.0
          %vm1502 = vcmp.gt.f32.partialorder %v1470, 0.0
          %vm1503 = vcmp.gt.f32.partialorder %v1471, 0.0
          %vm1504 = vcmp.gt.f32.partialorder %v1472, 0.0
          %vm1505 = vcmp.gt.f32.partialorder %v1473, 0.0
          %vm1506 = vcmp.gt.f32.partialorder %v1474, 0.0
          %vm1507 = vcmp.gt.f32.partialorder %v1475, 0.0
          %vm1508 = vcmp.gt.f32.partialorder %v1476, 0.0
          %vm1509 = vcmp.gt.f32.partialorder %v1477, 0.0
          %vm1510 = vcmp.gt.f32.partialorder %v1478, 0.0
          %vm1511 = vcmp.gt.f32.partialorder %v1479, 0.0
          %vm1512 = vcmp.gt.f32.partialorder %v1480, 0.0
          %vm1513 = vcmp.gt.f32.partialorder %v1481, 0.0
          %vm1514 = vcmp.gt.f32.partialorder %v1482, 0.0
          %vm1515 = vcmp.gt.f32.partialorder %v1483, 0.0
          %vm1516 = vcmp.gt.f32.partialorder %v1484, 0.0
          %vm1517 = vcmp.gt.f32.partialorder %v1485, 0.0
          %vm1518 = vcmp.gt.f32.partialorder %v1486, 0.0
          %1520 = vset.pattern.permute.xlu0 3
          %1521 = vperm.xlu0 %1520, %v1344
          %v1522 = vpop.permute.xlu0 %1521
          %v1556 = vcombine.high %v1455, %v1455
          %v1557 = vcombine.high %v1456, %v1456
          %v1558 = vcombine.high %v1457, %v1457
          %v1559 = vcombine.high %v1458, %v1458
          %v1560 = vcombine.high %v1459, %v1459
          %v1561 = vcombine.high %v1460, %v1460
          %v1562 = vcombine.high %v1461, %v1461
          %v1563 = vcombine.high %v1462, %v1462
          %v1564 = vcombine.high %v1463, %v1463
          %v1565 = vcombine.high %v1464, %v1464
          %v1566 = vcombine.high %v1465, %v1465
          %v1567 = vcombine.high %v1466, %v1466
          %v1568 = vcombine.high %v1467, %v1467
          %v1569 = vcombine.high %v1468, %v1468
          %v1570 = vcombine.high %v1469, %v1469
          %v1571 = vcombine.high %v1470, %v1470
          %v1572 = vcombine.high %v1471, %v1471
          %v1573 = vcombine.high %v1472, %v1472
          %v1574 = vcombine.high %v1473, %v1473
          %v1575 = vcombine.high %v1474, %v1474
          %v1576 = vcombine.high %v1475, %v1475
          %v1577 = vcombine.high %v1476, %v1476
          %v1578 = vcombine.high %v1477, %v1477
          %v1579 = vcombine.high %v1478, %v1478
          %v1580 = vcombine.high %v1479, %v1479
          %v1581 = vcombine.high %v1480, %v1480
          %v1582 = vcombine.high %v1481, %v1481
          %v1583 = vcombine.high %v1482, %v1482
          %v1584 = vcombine.high %v1483, %v1483
          %v1585 = vcombine.high %v1484, %v1484
          %v1586 = vcombine.high %v1485, %v1485
          %v1587 = vcombine.high %v1486, %v1486
          %v1620 = vmul.f32 %v1522, %v1455
          %v1621 = vmul.f32 %v1522, %v1556
          %v1622 = vmul.f32 %v1522, %v1456
          %v1623 = vmul.f32 %v1522, %v1557
          %v1624 = vmul.f32 %v1522, %v1457
          %v1625 = vmul.f32 %v1522, %v1558
          %v1626 = vmul.f32 %v1522, %v1458
          %v1627 = vmul.f32 %v1522, %v1559
          %v1628 = vmul.f32 %v1522, %v1459
          %v1629 = vmul.f32 %v1522, %v1560
          %v1630 = vmul.f32 %v1522, %v1460
          %v1631 = vmul.f32 %v1522, %v1561
          %v1632 = vmul.f32 %v1522, %v1461
          %v1633 = vmul.f32 %v1522, %v1562
          %v1634 = vmul.f32 %v1522, %v1462
          %v1635 = vmul.f32 %v1522, %v1563
          %v1636 = vmul.f32 %v1522, %v1463
          %v1637 = vmul.f32 %v1522, %v1564
          %v1638 = vmul.f32 %v1522, %v1464
          %v1639 = vmul.f32 %v1522, %v1565
          %v1640 = vmul.f32 %v1522, %v1465
          %v1641 = vmul.f32 %v1522, %v1566
          %v1642 = vmul.f32 %v1522, %v1466
          %v1643 = vmul.f32 %v1522, %v1567
          %v1644 = vmul.f32 %v1522, %v1467
          %v1645 = vmul.f32 %v1522, %v1568
          %v1646 = vmul.f32 %v1522, %v1468
          %v1647 = vmul.f32 %v1522, %v1569
          %v1648 = vmul.f32 %v1522, %v1469
          %v1649 = vmul.f32 %v1522, %v1570
          %v1650 = vmul.f32 %v1522, %v1470
          %v1651 = vmul.f32 %v1522, %v1571
          %v1652 = vmul.f32 %v1522, %v1471
          %v1653 = vmul.f32 %v1522, %v1572
          %v1654 = vmul.f32 %v1522, %v1472
          %v1655 = vmul.f32 %v1522, %v1573
          %v1656 = vmul.f32 %v1522, %v1473
          %v1657 = vmul.f32 %v1522, %v1574
          %v1658 = vmul.f32 %v1522, %v1474
          %v1659 = vmul.f32 %v1522, %v1575
          %v1660 = vmul.f32 %v1522, %v1475
          %v1661 = vmul.f32 %v1522, %v1576
          %v1662 = vmul.f32 %v1522, %v1476
          %v1663 = vmul.f32 %v1522, %v1577
          %v1664 = vmul.f32 %v1522, %v1477
          %v1665 = vmul.f32 %v1522, %v1578
          %v1666 = vmul.f32 %v1522, %v1478
          %v1667 = vmul.f32 %v1522, %v1579
          %v1668 = vmul.f32 %v1522, %v1479
          %v1669 = vmul.f32 %v1522, %v1580
          %v1670 = vmul.f32 %v1522, %v1480
          %v1671 = vmul.f32 %v1522, %v1581
          %v1672 = vmul.f32 %v1522, %v1481
          %v1673 = vmul.f32 %v1522, %v1582
          %v1674 = vmul.f32 %v1522, %v1482
          %v1675 = vmul.f32 %v1522, %v1583
          %v1676 = vmul.f32 %v1522, %v1483
          %v1677 = vmul.f32 %v1522, %v1584
          %v1678 = vmul.f32 %v1522, %v1484
          %v1679 = vmul.f32 %v1522, %v1585
          %v1680 = vmul.f32 %v1522, %v1485
          %v1681 = vmul.f32 %v1522, %v1586
          %v1682 = vmul.f32 %v1522, %v1486
          %v1683 = vmul.f32 %v1522, %v1587
          %v1748 = vcombine.low %v1620, %v1621
          %v1749 = vcombine.low %v1622, %v1623
          %v1750 = vcombine.low %v1624, %v1625
          %v1751 = vcombine.low %v1626, %v1627
          %v1752 = vcombine.low %v1628, %v1629
          %v1753 = vcombine.low %v1630, %v1631
          %v1754 = vcombine.low %v1632, %v1633
          %v1755 = vcombine.low %v1634, %v1635
          %v1756 = vcombine.low %v1636, %v1637
          %v1757 = vcombine.low %v1638, %v1639
          %v1758 = vcombine.low %v1640, %v1641
          %v1759 = vcombine.low %v1642, %v1643
          %v1760 = vcombine.low %v1644, %v1645
          %v1761 = vcombine.low %v1646, %v1647
          %v1762 = vcombine.low %v1648, %v1649
          %v1763 = vcombine.low %v1650, %v1651
          %v1764 = vcombine.low %v1652, %v1653
          %v1765 = vcombine.low %v1654, %v1655
          %v1766 = vcombine.low %v1656, %v1657
          %v1767 = vcombine.low %v1658, %v1659
          %v1768 = vcombine.low %v1660, %v1661
          %v1769 = vcombine.low %v1662, %v1663
          %v1770 = vcombine.low %v1664, %v1665
          %v1771 = vcombine.low %v1666, %v1667
          %v1772 = vcombine.low %v1668, %v1669
          %v1773 = vcombine.low %v1670, %v1671
          %v1774 = vcombine.low %v1672, %v1673
          %v1775 = vcombine.low %v1674, %v1675
          %v1776 = vcombine.low %v1676, %v1677
          %v1777 = vcombine.low %v1678, %v1679
          %v1778 = vcombine.low %v1680, %v1681
          %v1779 = vcombine.low %v1682, %v1683
          %v1812 = vsel %vm1487, %v1455, %v1748
          %v1813 = vsel %vm1488, %v1456, %v1749
          %v1814 = vsel %vm1489, %v1457, %v1750
          %v1815 = vsel %vm1490, %v1458, %v1751
          %v1816 = vsel %vm1491, %v1459, %v1752
          %v1817 = vsel %vm1492, %v1460, %v1753
          %v1818 = vsel %vm1493, %v1461, %v1754
          %v1819 = vsel %vm1494, %v1462, %v1755
          %v1820 = vsel %vm1495, %v1463, %v1756
          %v1821 = vsel %vm1496, %v1464, %v1757
          %v1822 = vsel %vm1497, %v1465, %v1758
          %v1823 = vsel %vm1498, %v1466, %v1759
          %v1824 = vsel %vm1499, %v1467, %v1760
          %v1825 = vsel %vm1500, %v1468, %v1761
          %v1826 = vsel %vm1501, %v1469, %v1762
          %v1827 = vsel %vm1502, %v1470, %v1763
          %v1828 = vsel %vm1503, %v1471, %v1764
          %v1829 = vsel %vm1504, %v1472, %v1765
          %v1830 = vsel %vm1505, %v1473, %v1766
          %v1831 = vsel %vm1506, %v1474, %v1767
          %v1832 = vsel %vm1507, %v1475, %v1768
          %v1833 = vsel %vm1508, %v1476, %v1769
          %v1834 = vsel %vm1509, %v1477, %v1770
          %v1835 = vsel %vm1510, %v1478, %v1771
          %v1836 = vsel %vm1511, %v1479, %v1772
          %v1837 = vsel %vm1512, %v1480, %v1773
          %v1838 = vsel %vm1513, %v1481, %v1774
          %v1839 = vsel %vm1514, %v1482, %v1775
          %v1840 = vsel %vm1515, %v1483, %v1776
          %v1841 = vsel %vm1516, %v1484, %v1777
          %v1842 = vsel %vm1517, %v1485, %v1778
          %v1843 = vsel %vm1518, %v1486, %v1779
          %1844 = vst [vmem:[%s3] sm:$0xff] %v1812
          %1845 = vst [vmem:[%s3 + $0x8] sm:$0xff] %v1813
          %1846 = vst [vmem:[%s3 + $0x10] sm:$0xff] %v1814
          %1847 = vst [vmem:[%s3 + $0x18] sm:$0xff] %v1815
          %1848 = vst [vmem:[%s3 + $0x20] sm:$0xff] %v1816
          %1849 = vst [vmem:[%s3 + $0x28] sm:$0xff] %v1817
          %1850 = vst [vmem:[%s3 + $0x30] sm:$0xff] %v1818
          %1851 = vst [vmem:[%s3 + $0x38] sm:$0xff] %v1819
          %1852 = vst [vmem:[%s3 + $0x40] sm:$0xff] %v1820
          %1853 = vst [vmem:[%s3 + $0x48] sm:$0xff] %v1821
          %1854 = vst [vmem:[%s3 + $0x50] sm:$0xff] %v1822
          %1855 = vst [vmem:[%s3 + $0x58] sm:$0xff] %v1823
          %1856 = vst [vmem:[%s3 + $0x60] sm:$0xff] %v1824
          %1857 = vst [vmem:[%s3 + $0x68] sm:$0xff] %v1825
          %1858 = vst [vmem:[%s3 + $0x70] sm:$0xff] %v1826
          %1859 = vst [vmem:[%s3 + $0x78] sm:$0xff] %v1827
          %1860 = vst [vmem:[%s3 + $0x80] sm:$0xff] %v1828
          %1861 = vst [vmem:[%s3 + $0x88] sm:$0xff] %v1829
          %1862 = vst [vmem:[%s3 + $0x90] sm:$0xff] %v1830
          %1863 = vst [vmem:[%s3 + $0x98] sm:$0xff] %v1831
          %1864 = vst [vmem:[%s3 + $0xa0] sm:$0xff] %v1832
          %1865 = vst [vmem:[%s3 + $0xa8] sm:$0xff] %v1833
          %1866 = vst [vmem:[%s3 + $0xb0] sm:$0xff] %v1834
          %1867 = vst [vmem:[%s3 + $0xb8] sm:$0xff] %v1835
          %1868 = vst [vmem:[%s3 + $0xc0] sm:$0xff] %v1836
          %1869 = vst [vmem:[%s3 + $0xc8] sm:$0xff] %v1837
          %1870 = vst [vmem:[%s3 + $0xd0] sm:$0xff] %v1838
          %1871 = vst [vmem:[%s3 + $0xd8] sm:$0xff] %v1839
          %1872 = vst [vmem:[%s3 + $0xe0] sm:$0xff] %v1840
          %1873 = vst [vmem:[%s3 + $0xe8] sm:$0xff] %v1841
          %1874 = vst [vmem:[%s3 + $0xf0] sm:$0xff] %v1842
          %1875 = vst [vmem:[%s3 + $0xf8] sm:$0xff] %v1843
        $region63: #{net_out_single_block_forward.1} parent=50 // pred_fallthru
          _
        // Predicated region
        $region64: #{net_out_single_block_forward.1} parent=50 // pred_check
          %p1876 = pneg %p95
        $region65: #{net_out_single_block_forward.1} parent=50 // pred_check_branch
          %1878 = sbr.rel (%p1876) target = $region67
        $region66: #{net_out_single_block_forward.1} parent=50 // pred_region
          _
        $region67: #{net_out_single_block_forward.1} parent=50 // pred_fallthru
          _
        // Predicated region
        $region68: #{net_out_single_block_forward.1} parent=50 // pred_check
          %p1879 = pneg %p95
        $region69: #{net_out_single_block_forward.1} parent=50 // pred_check_branch
          %1881 = sbr.rel (%p1879) target = $region71
        $region70: #{net_out_single_block_forward.1} parent=50 // pred_region
          _
        $region71: #{net_out_single_block_forward.1} parent=50 // pred_fallthru
          _
      $region51: #{net_out_single_block_forward.1} parent=5 // pred_fallthru
        _
      %p1882 = scmp.le.s32.totalorder 2, %s9
      // Predicated region
      $region72: #{net_out_single_block_forward.1} parent=5 // pred_check
        %p1883 = pneg %p1882
      $region73: #{net_out_single_block_forward.1} parent=5 // pred_check_branch
        %1885 = sbr.rel (%p1883) target = $region75
      $region74: #{net_out_single_block_forward.1} parent=5 // pred_region
        %s1886 = ssub.s32 %s9, 2
      $region75: #{net_out_single_block_forward.1} parent=5 // pred_fallthru
        _
    $region6: #{net_out_single_block_forward.1} parent=1 // loop_footer
      %s13 = sadd.s32 1, %s9
    $region7: #{net_out_single_block_forward.1} parent=1 // loop_footer_branch
      %8 = sbr.rel target = $region3
    $region8: #{net_out_single_block_forward.1} parent=1 // loop_exit
      _

</llo_original>
